<compile_context>
chip_gen: v7x
topology: tpu7x:2x2x1
jax: 0.10.0
libtpu: 0.0.40
codegen_flags: <defaults>
</compile_context>

<pallas_src>
import jax
import jax.numpy as jnp
from jax import lax
from jax.experimental import pallas as pl
from jax.experimental.pallas import tpu as pltpu

# ---- model / problem sizes (small, TPU-tile friendly) -----------------------
VOCAB_SIZE = 32        # stand-in for len(VOCAB)
TEXT_OUT   = 64
TYPE_IN    = 3
TYPE_OUT   = 64
NODE_DIM   = TEXT_OUT + TYPE_OUT       # 128  (NodeEncoder.out_dim)
NODE_TAB   = 128                       # padded rows: VOCAB (32) + TYPE_IN (3) -> 128
FLOW_IN    = 3
FLOW_TAB   = 8                         # padded flow-embedding rows
EDGE_DIM   = 128                       # EdgeEncoder out_dim
MSG_DIM    = 128                       # GNN message hidden
GNN_OUT    = 256                       # GNN.out_dim
NUM_ACT    = 16                        # action_space.n (synthetic)
HEAD_PAD   = 128                       # policy (16) + value (1) cols, zero padded

B = 2                                  # batch of graphs
N = 16                                 # nodes per graph (padded)
E = 32                                 # edges per graph (padded)
BN = B * N                             # 32
BE = B * E                             # 64
IDX_COLS = 4                           # packed index columns: text, type, flow, src

# ---- row offsets inside the packed weight slabs (all multiples of 8) --------
R_NODE  = 0                            # node_tab        [128, 128]
R_FLOW  = R_NODE + NODE_TAB            # flow_tab        [  8, 128]
R_WMS   = R_FLOW + FLOW_TAB            # W_msg (node)    [128, 128]
R_WME   = R_WMS + NODE_DIM             # W_msg (edge)    [128, 128]
R_BMSG  = R_WME + EDGE_DIM             # b_msg           [  1, 128] (8-row pad)
R_WHEAD = R_BMSG + 8                   # W_head          [256, 128]
R_BHEAD = R_WHEAD + GNN_OUT            # b_head          [  1, 128] (8-row pad)
R_READ  = R_BHEAD + 8                  # readout const   [  B, 128] (8-row pad)
WIDE_ROWS = R_READ + 8                 # 672

RU_WUX = 0                             # W_upd (node)    [128, 256]
RU_WUA = RU_WUX + NODE_DIM             # W_upd (agg)     [128, 256]
RU_B   = RU_WUA + MSG_DIM              # b_upd           [  1, 256] (8-row pad)
UPD_ROWS = RU_B + 8                    # 264


# ---- single fused Pallas kernel ---------------------------------------------
def fused_fwd_kernel(idx_ref, dst_ref, wide_ref, upd_ref, out_ref):
    f32 = jnp.float32

    # -- static views into the packed weight slabs (8-aligned row offsets) ----
    node_tab = wide_ref[R_NODE:R_NODE + NODE_TAB, :]        # [128, 128]
    flow_tab = wide_ref[R_FLOW:R_FLOW + FLOW_TAB, :]        # [8, 128]
    w_ms     = wide_ref[R_WMS:R_WMS + NODE_DIM, :]          # [128, 128]
    w_me     = wide_ref[R_WME:R_WME + EDGE_DIM, :]          # [128, 128]
    b_msg    = wide_ref[R_BMSG:R_BMSG + 1, :]                # [1, 128]
    w_head   = wide_ref[R_WHEAD:R_WHEAD + GNN_OUT, :]        # [256, 128]
    b_head   = wide_ref[R_BHEAD:R_BHEAD + 1, :]              # [1, 128]
    readout  = wide_ref[R_READ:R_READ + B, 0:BN]             # [B, BN] const 1/N mask
    w_ux     = upd_ref[RU_WUX:RU_WUX + NODE_DIM, :]          # [128, 256]
    w_ua     = upd_ref[RU_WUA:RU_WUA + MSG_DIM, :]           # [128, 256]
    b_upd    = upd_ref[RU_B:RU_B + 1, :]                     # [1, 256]

    # -- packed integer indices -----------------------------------------------
    text_id = idx_ref[0:BN, 0:1]                             # [BN, 1]
    type_id = idx_ref[0:BN, 1:2]                             # [BN, 1]
    flow_id = idx_ref[:, 2:3]                                # [BE, 1]
    src_g   = idx_ref[:, 3:4]                                # [BE, 1] global node idx
    dst_g   = dst_ref[...]                                   # [1, BE] global node idx

    # -- NodeEncoder: (text | type) one-hot @ block-diag table -> [BN, 128] ---
    ncol = lax.broadcasted_iota(jnp.int32, (BN, NODE_TAB), 1)
    node_oh = ((ncol == text_id) |
               (ncol == type_id + VOCAB_SIZE)).astype(f32)   # [BN, NODE_TAB]
    x = jnp.dot(node_oh, node_tab, preferred_element_type=f32)

    # -- EdgeEncoder: flow one-hot @ flow table -> [BE, 128] ------------------
    fcol = lax.broadcasted_iota(jnp.int32, (BE, FLOW_TAB), 1)
    ea = jnp.dot((fcol == flow_id).astype(f32), flow_tab,
                 preferred_element_type=f32)

    # -- message MLP (reassociated: project BN node rows, THEN gather) --------
    xm = jnp.dot(x, w_ms, preferred_element_type=f32)        # [BN, 128]
    gcol = lax.broadcasted_iota(jnp.int32, (BE, BN), 1)
    gath = (gcol == src_g).astype(f32)                       # [BE, BN]
    msg = jnp.maximum(jnp.dot(gath, xm, preferred_element_type=f32)
                      + jnp.dot(ea, w_me, preferred_element_type=f32)
                      + b_msg, 0.0)                          # [BE, MSG_DIM]

    # -- scatter-add over destination nodes (block-diagonal one-hot) ----------
    srow = lax.broadcasted_iota(jnp.int32, (BN, BE), 0)
    scat = (srow == dst_g).astype(f32)                       # [BN, BE]
    agg = jnp.dot(scat, msg, preferred_element_type=f32)     # [BN, MSG_DIM]

    # -- node update MLP (concat-free accumulating dots) ----------------------
    h = jnp.maximum(jnp.dot(x, w_ux, preferred_element_type=f32)
                    + jnp.dot(agg, w_ua, preferred_element_type=f32)
                    + b_upd, 0.0)                            # [BN, GNN_OUT]

    # -- per-graph mean readout via constant [B, BN] matrix from the slab -----
    g = jnp.dot(readout, h, preferred_element_type=f32)      # [B, GNN_OUT]

    # -- fused policy + value heads, lane-dense 128-wide output ---------------
    out_ref[...] = jnp.dot(g, w_head, preferred_element_type=f32) + b_head


def _vspec():
    return pl.BlockSpec(memory_space=pltpu.MemorySpace.VMEM)


def fused_forward(idx, dst_row, params):
    return pl.pallas_call(
        fused_fwd_kernel,
        out_shape=jax.ShapeDtypeStruct((B, HEAD_PAD), jnp.float32),
        in_specs=[_vspec(), _vspec(), _vspec(), _vspec()],
        out_specs=_vspec(),
    )(idx, dst_row, params["wide"], params["upd"])


# ---- full Model.forward (index packing fuses into one tiny XLA op under jit)
def model_forward(node_ids, edge_index, edge_attr, params):
    # node_ids:   [B, N, 2] int32  (text id, type id)
    # edge_index: [B, 2, E] int32  (rows = src, dst), per-graph local indices
    # edge_attr:  [B, E]    int32  (flow id)
    text = node_ids[..., 0].reshape(BN).astype(jnp.int32)
    typ  = node_ids[..., 1].reshape(BN).astype(jnp.int32)
    flow = edge_attr.reshape(BE).astype(jnp.int32)

    offs = (jnp.arange(B, dtype=jnp.int32) * N)[:, None]          # [B, 1]
    src_g = (edge_index[:, 0, :] + offs).reshape(BE).astype(jnp.int32)
    dst_g = (edge_index[:, 1, :] + offs).reshape(BE).astype(jnp.int32)

    idx = jnp.zeros((BE, IDX_COLS), jnp.int32)
    idx = idx.at[:BN, 0].set(text)
    idx = idx.at[:BN, 1].set(typ)
    idx = idx.at[:, 2].set(flow)
    idx = idx.at[:, 3].set(src_g)
    dst_row = dst_g.reshape(1, BE)

    out = fused_forward(idx, dst_row, params)
    action_logits = out[:, :NUM_ACT]                               # [B, A]
    value = out[:, NUM_ACT]                                        # value_function()
    return action_logits, value


# ---- parameter init + slab packing ------------------------------------------
def init_raw_params(key):
    ks = jax.random.split(key, 9)
    sc = 0.05
    return {
        "text_emb": sc * jax.random.normal(ks[0], (VOCAB_SIZE, TEXT_OUT), jnp.float32),
        "type_emb": sc * jax.random.normal(ks[1], (TYPE_IN, TYPE_OUT), jnp.float32),
        "flow_emb": sc * jax.random.normal(ks[2], (FLOW_IN, EDGE_DIM), jnp.float32),
        "wms": sc * jax.random.normal(ks[3], (NODE_DIM, MSG_DIM), jnp.float32),
        "wme": sc * jax.random.normal(ks[4], (EDGE_DIM, MSG_DIM), jnp.float32),
        "bm":  jnp.zeros((1, MSG_DIM), jnp.float32),
        "wux": sc * jax.random.normal(ks[5], (NODE_DIM, GNN_OUT), jnp.float32),
        "wua": sc * jax.random.normal(ks[6], (MSG_DIM, GNN_OUT), jnp.float32),
        "bu":  jnp.zeros((1, GNN_OUT), jnp.float32),
        "wp":  sc * jax.random.normal(ks[7], (GNN_OUT, NUM_ACT), jnp.float32),
        "bp":  jnp.zeros((1, NUM_ACT), jnp.float32),
        "wv":  sc * jax.random.normal(ks[8], (GNN_OUT, 1), jnp.float32),
        "bv":  jnp.zeros((1, 1), jnp.float32),
    }


def pack_params(raw):
    wide = jnp.zeros((WIDE_ROWS, 128), jnp.float32)
    wide = wide.at[R_NODE:R_NODE + VOCAB_SIZE, :TEXT_OUT].set(raw["text_emb"])
    wide = wide.at[R_NODE + VOCAB_SIZE:R_NODE + VOCAB_SIZE + TYPE_IN, TEXT_OUT:].set(raw["type_emb"])
    wide = wide.at[R_FLOW:R_FLOW + FLOW_IN, :].set(raw["flow_emb"])
    wide = wide.at[R_WMS:R_WMS + NODE_DIM, :].set(raw["wms"])
    wide = wide.at[R_WME:R_WME + EDGE_DIM, :].set(raw["wme"])
    wide = wide.at[R_BMSG, :].set(raw["bm"][0])
    wide = wide.at[R_WHEAD:R_WHEAD + GNN_OUT, :NUM_ACT].set(raw["wp"])
    wide = wide.at[R_WHEAD:R_WHEAD + GNN_OUT, NUM_ACT:NUM_ACT + 1].set(raw["wv"])
    wide = wide.at[R_BHEAD, :NUM_ACT].set(raw["bp"][0])
    wide = wide.at[R_BHEAD, NUM_ACT:NUM_ACT + 1].set(raw["bv"][0])

    # constant per-graph mean-readout matrix: row b has 1/N at lanes [b*N, b*N+N)
    lane = jnp.arange(128)[None, :]
    gidx = jnp.arange(B)[:, None]
    readout = jnp.where((lane >= gidx * N) & (lane < gidx * N + N),
                        1.0 / N, 0.0).astype(jnp.float32)          # [B, 128]
    wide = wide.at[R_READ:R_READ + B, :].set(readout)

    upd = jnp.zeros((UPD_ROWS, GNN_OUT), jnp.float32)
    upd = upd.at[RU_WUX:RU_WUX + NODE_DIM, :].set(raw["wux"])
    upd = upd.at[RU_WUA:RU_WUA + MSG_DIM, :].set(raw["wua"])
    upd = upd.at[RU_B, :].set(raw["bu"][0])

    return {"wide": wide, "upd": upd}


# ---- pure-JAX reference (same assumed GNN semantics) -------------------------
def reference_forward(node_ids, edge_index, edge_attr, raw):
    text, typ = node_ids[..., 0], node_ids[..., 1]
    x = jnp.concatenate([raw["text_emb"][text], raw["type_emb"][typ]], axis=-1)   # [B,N,128]
    ea = raw["flow_emb"][edge_attr]                                               # [B,E,128]
    src, dst = edge_index[:, 0, :], edge_index[:, 1, :]                           # [B,E]
    xs = x[jnp.arange(B)[:, None], src]                                           # [B,E,128]
    msg = jax.nn.relu(xs @ raw["wms"] + ea @ raw["wme"] + raw["bm"])              # [B,E,128]
    agg = jnp.zeros((B, N, MSG_DIM), jnp.float32)
    agg = agg.at[jnp.arange(B)[:, None], dst].add(msg)                            # sum-aggregate
    h = jax.nn.relu(x @ raw["wux"] + agg @ raw["wua"] + raw["bu"])                # [B,N,256]
    g = h.mean(axis=1)                                                            # mean readout
    logits = g @ raw["wp"] + raw["bp"]
    value = (g @ raw["wv"] + raw["bv"])[:, 0]
    return logits, value


# TODO(synk): the real GNN / EdgeEncoder internals (message MLP depth, mean vs
# sum aggregation, positional edge encoding) are not visible from the given
# module; one message-passing layer with sum aggregation + mean readout is
# implemented here.
# TODO(synk): no padding masks -- for real variable-size graphs, padded
# edges/nodes would need masking before the scatter and the mean readout.

if __name__ == "__main__":
    key = jax.random.PRNGKey(0)
    k1, k2, k3, k4, kp = jax.random.split(key, 5)

    text_ids = jax.random.randint(k1, (B, N, 1), 0, VOCAB_SIZE, dtype=jnp.int32)
    type_ids = jax.random.randint(k2, (B, N, 1), 0, TYPE_IN, dtype=jnp.int32)
    node_ids = jnp.concatenate([text_ids, type_ids], axis=-1)       # [B, N, 2]
    edge_index = jax.random.randint(k3, (B, 2, E), 0, N, dtype=jnp.int32)
    edge_attr = jax.random.randint(k4, (B, E), 0, FLOW_IN, dtype=jnp.int32)

    raw = init_raw_params(kp)
    params = pack_params(raw)

    fwd = jax.jit(model_forward)
    action_logits, value = fwd(node_ids, edge_index, edge_attr, params)
    jax.block_until_ready((action_logits, value))

    ref_logits, ref_value = reference_forward(node_ids, edge_index, edge_attr, raw)

    assert action_logits.shape == (B, NUM_ACT)
    assert value.shape == (B,)
    assert bool(jnp.all(jnp.isfinite(action_logits)))
    assert bool(jnp.all(jnp.isfinite(value)))
    assert bool(jnp.allclose(action_logits, ref_logits, atol=1e-4, rtol=1e-4))
    assert bool(jnp.allclose(value, ref_value, atol=1e-4, rtol=1e-4))
    print("KERNEL_OK")
</pallas_src>

<mosaic_0001>
module attributes {stable_mosaic.version = 11 : i64} {
  func.func @fused_fwd_kernel(%arg0: memref<64x4xi32, #tpu.memory_space<vmem>>, %arg1: memref<1x64xi32, #tpu.memory_space<vmem>>, %arg2: memref<672x128xf32, #tpu.memory_space<vmem>>, %arg3: memref<264x256xf32, #tpu.memory_space<vmem>>, %arg4: memref<2x128xf32, #tpu.memory_space<vmem>>) attributes {dimension_semantics = [], scalar_prefetch = 0 : i64, scratch_operands = 0 : i64, tpu.core_type = #tpu.core_type<tc>} {
    %c0 = arith.constant 0 : index
    %c0_0 = arith.constant 0 : index
    %0 = vector.load %arg2[%c0, %c0_0] : memref<672x128xf32, #tpu.memory_space<vmem>>, vector<128x128xf32>
    %c128 = arith.constant 128 : index
    %c0_1 = arith.constant 0 : index
    %1 = vector.load %arg2[%c128, %c0_1] : memref<672x128xf32, #tpu.memory_space<vmem>>, vector<8x128xf32>
    %c136 = arith.constant 136 : index
    %c0_2 = arith.constant 0 : index
    %2 = vector.load %arg2[%c136, %c0_2] : memref<672x128xf32, #tpu.memory_space<vmem>>, vector<128x128xf32>
    %c264 = arith.constant 264 : index
    %c0_3 = arith.constant 0 : index
    %3 = vector.load %arg2[%c264, %c0_3] : memref<672x128xf32, #tpu.memory_space<vmem>>, vector<128x128xf32>
    %c392 = arith.constant 392 : index
    %c0_4 = arith.constant 0 : index
    %4 = vector.load %arg2[%c392, %c0_4] : memref<672x128xf32, #tpu.memory_space<vmem>>, vector<1x128xf32>
    %c400 = arith.constant 400 : index
    %c0_5 = arith.constant 0 : index
    %5 = vector.load %arg2[%c400, %c0_5] : memref<672x128xf32, #tpu.memory_space<vmem>>, vector<256x128xf32>
    %c656 = arith.constant 656 : index
    %c0_6 = arith.constant 0 : index
    %6 = vector.load %arg2[%c656, %c0_6] : memref<672x128xf32, #tpu.memory_space<vmem>>, vector<1x128xf32>
    %c664 = arith.constant 664 : index
    %c0_7 = arith.constant 0 : index
    %7 = vector.load %arg2[%c664, %c0_7] : memref<672x128xf32, #tpu.memory_space<vmem>>, vector<2x32xf32>
    %c0_8 = arith.constant 0 : index
    %c0_9 = arith.constant 0 : index
    %8 = vector.load %arg3[%c0_8, %c0_9] : memref<264x256xf32, #tpu.memory_space<vmem>>, vector<128x256xf32>
    %c128_10 = arith.constant 128 : index
    %c0_11 = arith.constant 0 : index
    %9 = vector.load %arg3[%c128_10, %c0_11] : memref<264x256xf32, #tpu.memory_space<vmem>>, vector<128x256xf32>
    %c256 = arith.constant 256 : index
    %c0_12 = arith.constant 0 : index
    %10 = vector.load %arg3[%c256, %c0_12] : memref<264x256xf32, #tpu.memory_space<vmem>>, vector<1x256xf32>
    %c0_13 = arith.constant 0 : index
    %c0_14 = arith.constant 0 : index
    %11 = vector.load %arg0[%c0_13, %c0_14] : memref<64x4xi32, #tpu.memory_space<vmem>>, vector<32x1xi32>
    %c0_15 = arith.constant 0 : index
    %c1 = arith.constant 1 : index
    %12 = vector.load %arg0[%c0_15, %c1] : memref<64x4xi32, #tpu.memory_space<vmem>>, vector<32x1xi32>
    %c0_16 = arith.constant 0 : index
    %c2 = arith.constant 2 : index
    %13 = vector.load %arg0[%c0_16, %c2] : memref<64x4xi32, #tpu.memory_space<vmem>>, vector<64x1xi32>
    %c0_17 = arith.constant 0 : index
    %c3 = arith.constant 3 : index
    %14 = vector.load %arg0[%c0_17, %c3] : memref<64x4xi32, #tpu.memory_space<vmem>>, vector<64x1xi32>
    %c0_18 = arith.constant 0 : index
    %c0_19 = arith.constant 0 : index
    %15 = vector.load %arg1[%c0_18, %c0_19] : memref<1x64xi32, #tpu.memory_space<vmem>>, vector<1x64xi32>
    %16 = tpu.iota {dimensions = array<i32: 1>} : vector<32x128xi32>
    %17 = vector.broadcast %11 : vector<32x1xi32> to vector<32x128xi32>
    %18 = arith.cmpi eq, %16, %17 : vector<32x128xi32>
    %c32_i32 = arith.constant 32 : i32
    %19 = vector.broadcast %c32_i32 : i32 to vector<32x1xi32>
    %20 = arith.addi %12, %19 : vector<32x1xi32>
    %21 = vector.broadcast %20 : vector<32x1xi32> to vector<32x128xi32>
    %22 = arith.cmpi eq, %16, %21 : vector<32x128xi32>
    %23 = arith.ori %18, %22 : vector<32x128xi1>
    %24 = arith.extui %23 : vector<32x128xi1> to vector<32x128xi32>
    %25 = arith.sitofp %24 : vector<32x128xi32> to vector<32x128xf32>
    %cst = arith.constant dense<0.000000e+00> : vector<32x128xf32>
    %26 = tpu.matmul %25, %0, %cst {dimension_numbers = #tpu.dot_dimension_numbers<[1], [0], [0], [1], [0, 0, 1, 1], [], []>} : vector<32x128xf32>, vector<128x128xf32>, vector<32x128xf32> -> vector<32x128xf32>
    %27 = tpu.iota {dimensions = array<i32: 1>} : vector<64x8xi32>
    %28 = vector.broadcast %13 : vector<64x1xi32> to vector<64x8xi32>
    %29 = arith.cmpi eq, %27, %28 : vector<64x8xi32>
    %30 = arith.extui %29 : vector<64x8xi1> to vector<64x8xi32>
    %31 = arith.sitofp %30 : vector<64x8xi32> to vector<64x8xf32>
    %cst_20 = arith.constant dense<0.000000e+00> : vector<64x128xf32>
    %32 = tpu.matmul %31, %1, %cst_20 {dimension_numbers = #tpu.dot_dimension_numbers<[1], [0], [0], [1], [0, 0, 1, 1], [], []>} : vector<64x8xf32>, vector<8x128xf32>, vector<64x128xf32> -> vector<64x128xf32>
    %cst_21 = arith.constant dense<0.000000e+00> : vector<32x128xf32>
    %33 = tpu.matmul %26, %2, %cst_21 {dimension_numbers = #tpu.dot_dimension_numbers<[1], [0], [0], [1], [0, 0, 1, 1], [], []>} : vector<32x128xf32>, vector<128x128xf32>, vector<32x128xf32> -> vector<32x128xf32>
    %34 = tpu.iota {dimensions = array<i32: 1>} : vector<64x32xi32>
    %35 = vector.broadcast %14 : vector<64x1xi32> to vector<64x32xi32>
    %36 = arith.cmpi eq, %34, %35 : vector<64x32xi32>
    %37 = arith.extui %36 : vector<64x32xi1> to vector<64x32xi32>
    %38 = arith.sitofp %37 : vector<64x32xi32> to vector<64x32xf32>
    %cst_22 = arith.constant dense<0.000000e+00> : vector<64x128xf32>
    %39 = tpu.matmul %38, %33, %cst_22 {dimension_numbers = #tpu.dot_dimension_numbers<[1], [0], [0], [1], [0, 0, 1, 1], [], []>} : vector<64x32xf32>, vector<32x128xf32>, vector<64x128xf32> -> vector<64x128xf32>
    %cst_23 = arith.constant dense<0.000000e+00> : vector<64x128xf32>
    %40 = tpu.matmul %32, %3, %cst_23 {dimension_numbers = #tpu.dot_dimension_numbers<[1], [0], [0], [1], [0, 0, 1, 1], [], []>} : vector<64x128xf32>, vector<128x128xf32>, vector<64x128xf32> -> vector<64x128xf32>
    %41 = arith.addf %39, %40 : vector<64x128xf32>
    %42 = vector.broadcast %4 : vector<1x128xf32> to vector<64x128xf32>
    %43 = arith.addf %41, %42 : vector<64x128xf32>
    %cst_24 = arith.constant 0.000000e+00 : f32
    %44 = vector.broadcast %cst_24 : f32 to vector<64x128xf32>
    %45 = arith.maximumf %43, %44 : vector<64x128xf32>
    %46 = tpu.iota {dimensions = array<i32: 0>} : vector<32x64xi32>
    %47 = vector.broadcast %15 : vector<1x64xi32> to vector<32x64xi32>
    %48 = arith.cmpi eq, %46, %47 : vector<32x64xi32>
    %49 = arith.extui %48 : vector<32x64xi1> to vector<32x64xi32>
    %50 = arith.sitofp %49 : vector<32x64xi32> to vector<32x64xf32>
    %cst_25 = arith.constant dense<0.000000e+00> : vector<32x128xf32>
    %51 = tpu.matmul %50, %45, %cst_25 {dimension_numbers = #tpu.dot_dimension_numbers<[1], [0], [0], [1], [0, 0, 1, 1], [], []>} : vector<32x64xf32>, vector<64x128xf32>, vector<32x128xf32> -> vector<32x128xf32>
    %cst_26 = arith.constant dense<0.000000e+00> : vector<32x256xf32>
    %52 = tpu.matmul %26, %8, %cst_26 {dimension_numbers = #tpu.dot_dimension_numbers<[1], [0], [0], [1], [0, 0, 1, 1], [], []>} : vector<32x128xf32>, vector<128x256xf32>, vector<32x256xf32> -> vector<32x256xf32>
    %cst_27 = arith.constant dense<0.000000e+00> : vector<32x256xf32>
    %53 = tpu.matmul %51, %9, %cst_27 {dimension_numbers = #tpu.dot_dimension_numbers<[1], [0], [0], [1], [0, 0, 1, 1], [], []>} : vector<32x128xf32>, vector<128x256xf32>, vector<32x256xf32> -> vector<32x256xf32>
    %54 = arith.addf %52, %53 : vector<32x256xf32>
    %55 = vector.broadcast %10 : vector<1x256xf32> to vector<32x256xf32>
    %56 = arith.addf %54, %55 : vector<32x256xf32>
    %cst_28 = arith.constant 0.000000e+00 : f32
    %57 = vector.broadcast %cst_28 : f32 to vector<32x256xf32>
    %58 = arith.maximumf %56, %57 : vector<32x256xf32>
    %cst_29 = arith.constant dense<0.000000e+00> : vector<2x256xf32>
    %59 = tpu.matmul %7, %58, %cst_29 {dimension_numbers = #tpu.dot_dimension_numbers<[1], [0], [0], [1], [0, 0, 1, 1], [], []>} : vector<2x32xf32>, vector<32x256xf32>, vector<2x256xf32> -> vector<2x256xf32>
    %cst_30 = arith.constant dense<0.000000e+00> : vector<2x128xf32>
    %60 = tpu.matmul %59, %5, %cst_30 {dimension_numbers = #tpu.dot_dimension_numbers<[1], [0], [0], [1], [0, 0, 1, 1], [], []>} : vector<2x256xf32>, vector<256x128xf32>, vector<2x128xf32> -> vector<2x128xf32>
    %61 = vector.broadcast %6 : vector<1x128xf32> to vector<2x128xf32>
    %62 = arith.addf %60, %61 : vector<2x128xf32>
    %c0_31 = arith.constant 0 : index
    %c0_32 = arith.constant 0 : index
    %63 = vector.load %arg4[%c0_31, %c0_32] : memref<2x128xf32, #tpu.memory_space<vmem>>, vector<2x128xf32>
    tpu.vector_store %arg4[%c0_31, %c0_32], %62 {strides = array<i32>} : memref<2x128xf32, #tpu.memory_space<vmem>>, vector<2x128xf32>,
    return
  }
}

</mosaic_0001>

<llo_original>
// kernel: model_forward.1
$region0: #{model_forward.1}
  #allocation0 [shape = 'u32[]', space=smem, size = 0x4, offset = 0x4, fixed_abs, tag = 'smem constant byte address 0x4 - core index']
  #allocation1 [shape = 'u32[144,128]{1,0:T(1,128)}', space=vmem, size = 0x12000, scoped, tag = 'internal scratch']
  %s0 = inlined_call_operand.vmem [shape: s32[64,4], index: 0, kind: input, shape index: {}]
  %s1 = inlined_call_operand.vmem [shape: s32[1,64], index: 1, kind: input, shape index: {}]
  %s2 = inlined_call_operand.vmem [shape: f32[672,128], index: 2, kind: input, shape index: {}]
  %s3 = inlined_call_operand.hbm [shape: f32[264,256], index: 3, kind: input, shape index: {}]
  %s4 = inlined_call_operand.vmem [shape: f32[2,128], index: 4, kind: output, shape index: {}]
  %s5 = sld [smem:[#allocation0]]
  $region30: #{model_forward.1} parent=0
    _
  %s7 = ssub.s32 1, %s5
  %s8 = scalar_select 0, %s7, %s5
  $region1: #{model_forward.1} parent=0
    #allocation2 [shape = 'u8[270336]{0}', space=vmem, size = 0x42000, scoped, tag = 'input window, operand 3, single buffered']
    #allocation3 [shape = 's32[1]{0}', space=sflag, size = 0x4, scoped, tag = 'scoped memory for model_forward.1']
    %9 = vsyncpa [#allocation3], 0
    // Predicated region
    $region2: #{model_forward.1} parent=1 // pred_check
      _
    $region3: #{model_forward.1} parent=1 // pred_check_branch
      %11 = sbr.rel (0) target = $region5
    $region4: #{model_forward.1} parent=1 // pred_region
      _
    $region5: #{model_forward.1} parent=1 // pred_fallthru
      _
    // Predicated region
    $region6: #{model_forward.1} parent=1 // pred_check
      _
    $region7: #{model_forward.1} parent=1 // pred_check_branch
      %13 = sbr.rel (0) target = $region9
    $region8: #{model_forward.1} parent=1 // pred_region
      _
    $region9: #{model_forward.1} parent=1 // pred_fallthru
      _
    // Predicated region
    $region10: #{model_forward.1} parent=1 // pred_check
      _
    $region11: #{model_forward.1} parent=1 // pred_check_branch
      %15 = sbr.rel (0) target = $region13
    $region12: #{model_forward.1} parent=1 // pred_region
      _
    $region13: #{model_forward.1} parent=1 // pred_fallthru
      _
    // Predicated region
    $region14: #{model_forward.1} parent=1 // pred_check
      _
    $region15: #{model_forward.1} parent=1 // pred_check_branch
      %17 = sbr.rel (0) target = $region17
    $region16: #{model_forward.1} parent=1 // pred_region
      %s19 = ssub.s32 8448, 8448
      %20 = vsyncadd [#allocation3], %s19
      %s21 = sshll.u32 [#allocation2], 4
      %s22 = int_to_ptr.vmem [resolvable:$true] %s21
      %27 = dma.hbm_to_vmem [thread:$0]  %s3, 8448, %s22, [#allocation3], 256, 256, 16
    $region17: #{model_forward.1} parent=1 // pred_fallthru
      _
    // Predicated region
    $region18: #{model_forward.1} parent=1 // pred_check
      _
    $region19: #{model_forward.1} parent=1 // pred_check_branch
      %29 = sbr.rel (0) target = $region21
    $region20: #{model_forward.1} parent=1 // pred_region
      %30 = dma.done [#allocation3], 8448
    $region21: #{model_forward.1} parent=1 // pred_fallthru
      _
    %v31 = vld [vmem:[%s2] sm:$0xff]
    %v32 = vld [vmem:[%s2 + $0x8] sm:$0xff]
    %v33 = vld [vmem:[%s2 + $0x10] sm:$0xff]
    %v34 = vld [vmem:[%s2 + $0x18] sm:$0xff]
    %v35 = vld [vmem:[%s2 + $0x20] sm:$0xff]
    %v36 = vld [vmem:[%s2 + $0x28] sm:$0xff]
    %v37 = vld [vmem:[%s2 + $0x30] sm:$0xff]
    %v38 = vld [vmem:[%s2 + $0x38] sm:$0xff]
    %v39 = vld [vmem:[%s2 + $0x40] sm:$0xff]
    %v40 = vld [vmem:[%s2 + $0x48] sm:$0xff]
    %v41 = vld [vmem:[%s2 + $0x50] sm:$0xff]
    %v42 = vld [vmem:[%s2 + $0x58] sm:$0xff]
    %v43 = vld [vmem:[%s2 + $0x60] sm:$0xff]
    %v44 = vld [vmem:[%s2 + $0x68] sm:$0xff]
    %v45 = vld [vmem:[%s2 + $0x70] sm:$0xff]
    %v46 = vld [vmem:[%s2 + $0x78] sm:$0xff]
    %v47 = vld [vmem:[%s2 + $0x80] sm:$0xff]
    %v48 = vld [vmem:[%s2 + $0x88] sm:$0xff]
    %v49 = vld [vmem:[%s2 + $0x90] sm:$0xff]
    %v50 = vld [vmem:[%s2 + $0x98] sm:$0xff]
    %v51 = vld [vmem:[%s2 + $0xa0] sm:$0xff]
    %v52 = vld [vmem:[%s2 + $0xa8] sm:$0xff]
    %v53 = vld [vmem:[%s2 + $0xb0] sm:$0xff]
    %v54 = vld [vmem:[%s2 + $0xb8] sm:$0xff]
    %v55 = vld [vmem:[%s2 + $0xc0] sm:$0xff]
    %v56 = vld [vmem:[%s2 + $0xc8] sm:$0xff]
    %v57 = vld [vmem:[%s2 + $0xd0] sm:$0xff]
    %v58 = vld [vmem:[%s2 + $0xd8] sm:$0xff]
    %v59 = vld [vmem:[%s2 + $0xe0] sm:$0xff]
    %v60 = vld [vmem:[%s2 + $0xe8] sm:$0xff]
    %v61 = vld [vmem:[%s2 + $0xf0] sm:$0xff]
    %v62 = vld [vmem:[%s2 + $0xf8] sm:$0xff]
    %v63 = vld [vmem:[%s2 + $0x100] sm:$0xff]
    %v64 = vld [vmem:[%s2 + $0x108] sm:$0xff]
    %v65 = vld [vmem:[%s2 + $0x110] sm:$0xff]
    %v66 = vld [vmem:[%s2 + $0x118] sm:$0xff]
    %v67 = vld [vmem:[%s2 + $0x120] sm:$0xff]
    %v68 = vld [vmem:[%s2 + $0x128] sm:$0xff]
    %v69 = vld [vmem:[%s2 + $0x130] sm:$0xff]
    %v70 = vld [vmem:[%s2 + $0x138] sm:$0xff]
    %v71 = vld [vmem:[%s2 + $0x140] sm:$0xff]
    %v72 = vld [vmem:[%s2 + $0x148] sm:$0xff]
    %v73 = vld [vmem:[%s2 + $0x150] sm:$0xff]
    %v74 = vld [vmem:[%s2 + $0x158] sm:$0xff]
    %v75 = vld [vmem:[%s2 + $0x160] sm:$0xff]
    %v76 = vld [vmem:[%s2 + $0x168] sm:$0xff]
    %v77 = vld [vmem:[%s2 + $0x170] sm:$0xff]
    %v78 = vld [vmem:[%s2 + $0x178] sm:$0xff]
    %v79 = vld [vmem:[%s2 + $0x180] sm:$0xff]
    %v80 = vld [vmem:[%s2 + $0x188] sm:$0x1]
    %v81 = vld [vmem:[%s2 + $0x190] sm:$0xff]
    %v82 = vld [vmem:[%s2 + $0x198] sm:$0xff]
    %v83 = vld [vmem:[%s2 + $0x1a0] sm:$0xff]
    %v84 = vld [vmem:[%s2 + $0x1a8] sm:$0xff]
    %v85 = vld [vmem:[%s2 + $0x1b0] sm:$0xff]
    %v86 = vld [vmem:[%s2 + $0x1b8] sm:$0xff]
    %v87 = vld [vmem:[%s2 + $0x1c0] sm:$0xff]
    %v88 = vld [vmem:[%s2 + $0x1c8] sm:$0xff]
    %v89 = vld [vmem:[%s2 + $0x1d0] sm:$0xff]
    %v90 = vld [vmem:[%s2 + $0x1d8] sm:$0xff]
    %v91 = vld [vmem:[%s2 + $0x1e0] sm:$0xff]
    %v92 = vld [vmem:[%s2 + $0x1e8] sm:$0xff]
    %v93 = vld [vmem:[%s2 + $0x1f0] sm:$0xff]
    %v94 = vld [vmem:[%s2 + $0x1f8] sm:$0xff]
    %v95 = vld [vmem:[%s2 + $0x200] sm:$0xff]
    %v96 = vld [vmem:[%s2 + $0x208] sm:$0xff]
    %v97 = vld [vmem:[%s2 + $0x210] sm:$0xff]
    %v98 = vld [vmem:[%s2 + $0x218] sm:$0xff]
    %v99 = vld [vmem:[%s2 + $0x220] sm:$0xff]
    %v100 = vld [vmem:[%s2 + $0x228] sm:$0xff]
    %v101 = vld [vmem:[%s2 + $0x230] sm:$0xff]
    %v102 = vld [vmem:[%s2 + $0x238] sm:$0xff]
    %v103 = vld [vmem:[%s2 + $0x240] sm:$0xff]
    %v104 = vld [vmem:[%s2 + $0x248] sm:$0xff]
    %v105 = vld [vmem:[%s2 + $0x250] sm:$0xff]
    %v106 = vld [vmem:[%s2 + $0x258] sm:$0xff]
    %v107 = vld [vmem:[%s2 + $0x260] sm:$0xff]
    %v108 = vld [vmem:[%s2 + $0x268] sm:$0xff]
    %v109 = vld [vmem:[%s2 + $0x270] sm:$0xff]
    %v110 = vld [vmem:[%s2 + $0x278] sm:$0xff]
    %v111 = vld [vmem:[%s2 + $0x280] sm:$0xff]
    %v112 = vld [vmem:[%s2 + $0x288] sm:$0xff]
    %v113 = vld [vmem:[%s2 + $0x290] sm:$0x1]
    %v114 = vld [vmem:[%s2 + $0x298] sm:$0x3]
    %v115 = vld [vmem:[#allocation2] sm:$0xff]
    %v116 = vld [vmem:[#allocation2 + $0x8] sm:$0xff]
    %v117 = vld [vmem:[#allocation2 + $0x10] sm:$0xff]
    %v118 = vld [vmem:[#allocation2 + $0x18] sm:$0xff]
    %v119 = vld [vmem:[#allocation2 + $0x20] sm:$0xff]
    %v120 = vld [vmem:[#allocation2 + $0x28] sm:$0xff]
    %v121 = vld [vmem:[#allocation2 + $0x30] sm:$0xff]
    %v122 = vld [vmem:[#allocation2 + $0x38] sm:$0xff]
    %v123 = vld [vmem:[#allocation2 + $0x40] sm:$0xff]
    %v124 = vld [vmem:[#allocation2 + $0x48] sm:$0xff]
    %v125 = vld [vmem:[#allocation2 + $0x50] sm:$0xff]
    %v126 = vld [vmem:[#allocation2 + $0x58] sm:$0xff]
    %v127 = vld [vmem:[#allocation2 + $0x60] sm:$0xff]
    %v128 = vld [vmem:[#allocation2 + $0x68] sm:$0xff]
    %v129 = vld [vmem:[#allocation2 + $0x70] sm:$0xff]
    %v130 = vld [vmem:[#allocation2 + $0x78] sm:$0xff]
    %v131 = vld [vmem:[#allocation2 + $0x80] sm:$0xff]
    %v132 = vld [vmem:[#allocation2 + $0x88] sm:$0xff]
    %v133 = vld [vmem:[#allocation2 + $0x90] sm:$0xff]
    %v134 = vld [vmem:[#allocation2 + $0x98] sm:$0xff]
    %v135 = vld [vmem:[#allocation2 + $0xa0] sm:$0xff]
    %v136 = vld [vmem:[#allocation2 + $0xa8] sm:$0xff]
    %v137 = vld [vmem:[#allocation2 + $0xb0] sm:$0xff]
    %v138 = vld [vmem:[#allocation2 + $0xb8] sm:$0xff]
    %v139 = vld [vmem:[#allocation2 + $0xc0] sm:$0xff]
    %v140 = vld [vmem:[#allocation2 + $0xc8] sm:$0xff]
    %v141 = vld [vmem:[#allocation2 + $0xd0] sm:$0xff]
    %v142 = vld [vmem:[#allocation2 + $0xd8] sm:$0xff]
    %v143 = vld [vmem:[#allocation2 + $0xe0] sm:$0xff]
    %v144 = vld [vmem:[#allocation2 + $0xe8] sm:$0xff]
    %v145 = vld [vmem:[#allocation2 + $0xf0] sm:$0xff]
    %v146 = vld [vmem:[#allocation2 + $0xf8] sm:$0xff]
    %v147 = vld [vmem:[#allocation2 + $0x100] sm:$0xff]
    %v148 = vld [vmem:[#allocation2 + $0x108] sm:$0xff]
    %v149 = vld [vmem:[#allocation2 + $0x110] sm:$0xff]
    %v150 = vld [vmem:[#allocation2 + $0x118] sm:$0xff]
    %v151 = vld [vmem:[#allocation2 + $0x120] sm:$0xff]
    %v152 = vld [vmem:[#allocation2 + $0x128] sm:$0xff]
    %v153 = vld [vmem:[#allocation2 + $0x130] sm:$0xff]
    %v154 = vld [vmem:[#allocation2 + $0x138] sm:$0xff]
    %v155 = vld [vmem:[#allocation2 + $0x140] sm:$0xff]
    %v156 = vld [vmem:[#allocation2 + $0x148] sm:$0xff]
    %v157 = vld [vmem:[#allocation2 + $0x150] sm:$0xff]
    %v158 = vld [vmem:[#allocation2 + $0x158] sm:$0xff]
    %v159 = vld [vmem:[#allocation2 + $0x160] sm:$0xff]
    %v160 = vld [vmem:[#allocation2 + $0x168] sm:$0xff]
    %v161 = vld [vmem:[#allocation2 + $0x170] sm:$0xff]
    %v162 = vld [vmem:[#allocation2 + $0x178] sm:$0xff]
    %v163 = vld [vmem:[#allocation2 + $0x180] sm:$0xff]
    %v164 = vld [vmem:[#allocation2 + $0x188] sm:$0xff]
    %v165 = vld [vmem:[#allocation2 + $0x190] sm:$0xff]
    %v166 = vld [vmem:[#allocation2 + $0x198] sm:$0xff]
    %v167 = vld [vmem:[#allocation2 + $0x1a0] sm:$0xff]
    %v168 = vld [vmem:[#allocation2 + $0x1a8] sm:$0xff]
    %v169 = vld [vmem:[#allocation2 + $0x1b0] sm:$0xff]
    %v170 = vld [vmem:[#allocation2 + $0x1b8] sm:$0xff]
    %v171 = vld [vmem:[#allocation2 + $0x1c0] sm:$0xff]
    %v172 = vld [vmem:[#allocation2 + $0x1c8] sm:$0xff]
    %v173 = vld [vmem:[#allocation2 + $0x1d0] sm:$0xff]
    %v174 = vld [vmem:[#allocation2 + $0x1d8] sm:$0xff]
    %v175 = vld [vmem:[#allocation2 + $0x1e0] sm:$0xff]
    %v176 = vld [vmem:[#allocation2 + $0x1e8] sm:$0xff]
    %v177 = vld [vmem:[#allocation2 + $0x1f0] sm:$0xff]
    %v178 = vld [vmem:[#allocation2 + $0x1f8] sm:$0xff]
    %s179 = scalar_lea.vmem [#allocation2], 512
    %v180 = vld [vmem:[%s179] ss:$8 sm:$0x3]
    %v181 = vld [vmem:[%s0] sm:$0xff]
    %v182 = vld [vmem:[%s0 + $0x8] sm:$0xff]
    %v183 = vld [vmem:[%s0 + $0x10] sm:$0xff]
    %v184 = vld [vmem:[%s0 + $0x18] sm:$0xff]
    %v185 = vld [vmem:[%s0 + $0x20] sm:$0xff]
    %v186 = vld [vmem:[%s0 + $0x28] sm:$0xff]
    %v187 = vld [vmem:[%s0 + $0x30] sm:$0xff]
    %v188 = vld [vmem:[%s0 + $0x38] sm:$0xff]
    %v189 = vld [vmem:[%s1] sm:$0x1]
    %v190 = vlaneseq
    %v191 = vand.u32 %v190, 127
    %192 = vset.pattern.permute.xlu0 0
    %193 = vperm.xlu0 %192, %v181
    %v194 = vpop.permute.xlu0 %193
    %195 = vset.pattern.permute.xlu0 0
    %196 = vperm.xlu0 %195, %v182
    %v197 = vpop.permute.xlu0 %196
    %198 = vset.pattern.permute.xlu0 0
    %199 = vperm.xlu0 %198, %v183
    %v200 = vpop.permute.xlu0 %199
    %201 = vset.pattern.permute.xlu0 0
    %202 = vperm.xlu0 %201, %v184
    %v203 = vpop.permute.xlu0 %202
    %vm204 = vcmp.eq.s32.totalorder %v191, %v194
    %vm205 = vcmp.eq.s32.totalorder %v191, %v197
    %vm206 = vcmp.eq.s32.totalorder %v191, %v200
    %vm207 = vcmp.eq.s32.totalorder %v191, %v203
    %v208 = vadd.s32 %v181, 32
    %v209 = vadd.s32 %v182, 32
    %v210 = vadd.s32 %v183, 32
    %v211 = vadd.s32 %v184, 32
    %212 = vset.pattern.permute.xlu0 1
    %213 = vperm.xlu0 %212, %v208
    %v214 = vpop.permute.xlu0 %213
    %215 = vset.pattern.permute.xlu0 1
    %216 = vperm.xlu0 %215, %v209
    %v217 = vpop.permute.xlu0 %216
    %218 = vset.pattern.permute.xlu0 1
    %219 = vperm.xlu0 %218, %v210
    %v220 = vpop.permute.xlu0 %219
    %221 = vset.pattern.permute.xlu0 1
    %222 = vperm.xlu0 %221, %v211
    %v223 = vpop.permute.xlu0 %222
    %vm224 = vcmp.eq.s32.totalorder %v191, %v214
    %vm225 = vcmp.eq.s32.totalorder %v191, %v217
    %vm226 = vcmp.eq.s32.totalorder %v191, %v220
    %vm227 = vcmp.eq.s32.totalorder %v191, %v223
    %vm228 = vmor %vm204, %vm224
    %vm229 = vmor %vm205, %vm225
    %vm230 = vmor %vm206, %vm226
    %vm231 = vmor %vm207, %vm227
    %v232 = vsel %vm228, 1, 0
    %v233 = vsel %vm229, 1, 0
    %v234 = vsel %vm230, 1, 0
    %v235 = vsel %vm231, 1, 0
    %v236 = vcvt.s32.f32 %v232
    %v237 = vcvt.s32.f32 %v233
    %v238 = vcvt.s32.f32 %v234
    %v239 = vcvt.s32.f32 %v235
    %240 = vmatprep.subr.mxu0 0.0
    %241 = vmatpush1.msra.mxu0 %v31
    %242 = vmatprep.subr.mxu0 0.0
    %243 = vmatpush1.msra.mxu0 %v32
    %244 = vmatprep.subr.mxu0 0.0
    %245 = vmatpush1.msra.mxu0 %v33
    %246 = vmatprep.subr.mxu0 0.0
    %247 = vmatpush1.msra.mxu0 %v34
    %248 = vmatprep.subr.mxu0 0.0
    %249 = vmatpush1.msra.mxu0 %v35
    %250 = vmatprep.subr.mxu0 0.0
    %251 = vmatpush1.msra.mxu0 %v36
    %252 = vmatprep.subr.mxu0 0.0
    %253 = vmatpush1.msra.mxu0 %v37
    %254 = vmatprep.subr.mxu0 0.0
    %255 = vmatpush1.msra.mxu0 %v38
    %256 = vmatprep.subr.mxu0 0.0
    %257 = vmatpush1.msra.mxu0 %v39
    %258 = vmatprep.subr.mxu0 0.0
    %259 = vmatpush1.msra.mxu0 %v40
    %260 = vmatprep.subr.mxu0 0.0
    %261 = vmatpush1.msra.mxu0 %v41
    %262 = vmatprep.subr.mxu0 0.0
    %263 = vmatpush1.msra.mxu0 %v42
    %264 = vmatprep.subr.mxu0 0.0
    %265 = vmatpush1.msra.mxu0 %v43
    %266 = vmatprep.subr.mxu0 0.0
    %267 = vmatpush1.msra.mxu0 %v44
    %268 = vmatprep.subr.mxu0 0.0
    %269 = vmatpush1.msra.mxu0 %v45
    %270 = vmatprep.subr.mxu0 0.0
    %271 = vmatpush1.msra.mxu0 %v46
    %272 = vmatprep.subr.mxu0 0.0
    %273 = vmatpush1.msra.mxu0 0.0
    %274 = vmatprep.subr.mxu0 0.0
    %275 = vmatpush1.msra.mxu0 0.0
    %276 = vmatprep.subr.mxu0 0.0
    %277 = vmatpush1.msra.mxu0 0.0
    %278 = vmatprep.subr.mxu0 0.0
    %279 = vmatpush1.msra.mxu0 0.0
    %280 = vmatprep.subr.mxu0 0.0
    %281 = vmatpush1.msra.mxu0 0.0
    %282 = vmatprep.subr.mxu0 0.0
    %283 = vmatpush1.msra.mxu0 0.0
    %284 = vmatprep.subr.mxu0 0.0
    %285 = vmatpush1.msra.mxu0 0.0
    %286 = vmatprep.subr.mxu0 0.0
    %287 = vmatpush1.msra.mxu0 0.0
    %288 = vmatprep.subr.mxu0 0.0
    %289 = vmatpush1.msra.mxu0 0.0
    %290 = vmatprep.subr.mxu0 0.0
    %291 = vmatpush1.msra.mxu0 0.0
    %292 = vmatprep.subr.mxu0 0.0
    %293 = vmatpush1.msra.mxu0 0.0
    %294 = vmatprep.subr.mxu0 0.0
    %295 = vmatpush1.msra.mxu0 0.0
    %296 = vmatprep.subr.mxu0 0.0
    %297 = vmatpush1.msra.mxu0 0.0
    %298 = vmatprep.subr.mxu0 0.0
    %299 = vmatpush1.msra.mxu0 0.0
    %300 = vmatprep.subr.mxu0 0.0
    %301 = vmatpush1.msra.mxu0 0.0
    %302 = vmatprep.subr.mxu0 0.0
    %303 = vmatpush1.msra.mxu0 0.0
    %304 = vmatprep.mubr.f32.mxu0 0.0
    %305 = vmatmul.mubr.f32.gmra.mrb[0].mxu0 %v236
    %v306 = vpop.f32.mrb[0].mxu0
    %v307 = vadd.f32 0.0, %v306
    %v308 = vpop.f32.mrb[0].mxu0
    %309 = vmatprep.mubr.f32.mxu0 0.0
    %310 = vmatmul.mubr.f32.gmra.mrb[0].mxu0 %v237
    %v311 = vpop.f32.mrb[0].mxu0
    %v312 = vadd.f32 0.0, %v311
    %v313 = vpop.f32.mrb[0].mxu0
    %314 = vmatprep.mubr.f32.mxu0 0.0
    %315 = vmatmul.mubr.f32.gmra.mrb[0].mxu0 %v238
    %v316 = vpop.f32.mrb[0].mxu0
    %v317 = vadd.f32 0.0, %v316
    %v318 = vpop.f32.mrb[0].mxu0
    %319 = vmatprep.mubr.f32.mxu0 0.0
    %320 = vmatmul.mubr.f32.gmra.mrb[0].mxu0 %v239
    %v321 = vpop.f32.mrb[0].mxu0
    %v322 = vadd.f32 0.0, %v321
    %v323 = vpop.f32.mrb[0].mxu0
    %324 = vdwg.mxu0
    %325 = vset.pattern.permute.xlu0 2
    %326 = vperm.xlu0 %325, %v181
    %v327 = vpop.permute.xlu0 %326
    %328 = vset.pattern.permute.xlu0 2
    %329 = vperm.xlu0 %328, %v182
    %v330 = vpop.permute.xlu0 %329
    %331 = vset.pattern.permute.xlu0 2
    %332 = vperm.xlu0 %331, %v183
    %v333 = vpop.permute.xlu0 %332
    %334 = vset.pattern.permute.xlu0 2
    %335 = vperm.xlu0 %334, %v184
    %v336 = vpop.permute.xlu0 %335
    %337 = vset.pattern.permute.xlu0 2
    %338 = vperm.xlu0 %337, %v185
    %v339 = vpop.permute.xlu0 %338
    %340 = vset.pattern.permute.xlu0 2
    %341 = vperm.xlu0 %340, %v186
    %v342 = vpop.permute.xlu0 %341
    %343 = vset.pattern.permute.xlu0 2
    %344 = vperm.xlu0 %343, %v187
    %v345 = vpop.permute.xlu0 %344
    %346 = vset.pattern.permute.xlu0 2
    %347 = vperm.xlu0 %346, %v188
    %v348 = vpop.permute.xlu0 %347
    %vm349 = vcmp.eq.s32.totalorder %v191, %v327
    %vm350 = vcmp.eq.s32.totalorder %v191, %v330
    %vm351 = vcmp.eq.s32.totalorder %v191, %v333
    %vm352 = vcmp.eq.s32.totalorder %v191, %v336
    %vm353 = vcmp.eq.s32.totalorder %v191, %v339
    %vm354 = vcmp.eq.s32.totalorder %v191, %v342
    %vm355 = vcmp.eq.s32.totalorder %v191, %v345
    %vm356 = vcmp.eq.s32.totalorder %v191, %v348
    %v357 = vsel %vm349, 1, 0
    %v358 = vsel %vm350, 1, 0
    %v359 = vsel %vm351, 1, 0
    %v360 = vsel %vm352, 1, 0
    %v361 = vsel %vm353, 1, 0
    %v362 = vsel %vm354, 1, 0
    %v363 = vsel %vm355, 1, 0
    %v364 = vsel %vm356, 1, 0
    %v365 = vcvt.s32.f32 %v357
    %v366 = vcvt.s32.f32 %v358
    %v367 = vcvt.s32.f32 %v359
    %v368 = vcvt.s32.f32 %v360
    %v369 = vcvt.s32.f32 %v361
    %v370 = vcvt.s32.f32 %v362
    %v371 = vcvt.s32.f32 %v363
    %v372 = vcvt.s32.f32 %v364
    %vm373 = vcmask 64512
    %v375 = vsel %vm373, %v365, 0
    %v378 = vsel %vm373, %v366, 0
    %v381 = vsel %vm373, %v367, 0
    %v384 = vsel %vm373, %v368, 0
    %v387 = vsel %vm373, %v369, 0
    %v390 = vsel %vm373, %v370, 0
    %v393 = vsel %vm373, %v371, 0
    %v396 = vsel %vm373, %v372, 0
    %398 = vmatprep.subr.mxu0 0.0
    %399 = vmatpush1.msra.mxu0 %v47
    %400 = vmatprep.subr.mxu0 0.0
    %401 = vmatpush1.msra.mxu0 0.0
    %402 = vmatprep.subr.mxu0 0.0
    %403 = vmatpush1.msra.mxu0 0.0
    %404 = vmatprep.subr.mxu0 0.0
    %405 = vmatpush1.msra.mxu0 0.0
    %406 = vmatprep.subr.mxu0 0.0
    %407 = vmatpush1.msra.mxu0 0.0
    %408 = vmatprep.subr.mxu0 0.0
    %409 = vmatpush1.msra.mxu0 0.0
    %410 = vmatprep.subr.mxu0 0.0
    %411 = vmatpush1.msra.mxu0 0.0
    %412 = vmatprep.subr.mxu0 0.0
    %413 = vmatpush1.msra.mxu0 0.0
    %414 = vmatprep.subr.mxu0 0.0
    %415 = vmatpush1.msra.mxu0 0.0
    %416 = vmatprep.subr.mxu0 0.0
    %417 = vmatpush1.msra.mxu0 0.0
    %418 = vmatprep.subr.mxu0 0.0
    %419 = vmatpush1.msra.mxu0 0.0
    %420 = vmatprep.subr.mxu0 0.0
    %421 = vmatpush1.msra.mxu0 0.0
    %422 = vmatprep.subr.mxu0 0.0
    %423 = vmatpush1.msra.mxu0 0.0
    %424 = vmatprep.subr.mxu0 0.0
    %425 = vmatpush1.msra.mxu0 0.0
    %426 = vmatprep.subr.mxu0 0.0
    %427 = vmatpush1.msra.mxu0 0.0
    %428 = vmatprep.subr.mxu0 0.0
    %429 = vmatpush1.msra.mxu0 0.0
    %430 = vmatprep.subr.mxu0 0.0
    %431 = vmatpush1.msra.mxu0 0.0
    %432 = vmatprep.subr.mxu0 0.0
    %433 = vmatpush1.msra.mxu0 0.0
    %434 = vmatprep.subr.mxu0 0.0
    %435 = vmatpush1.msra.mxu0 0.0
    %436 = vmatprep.subr.mxu0 0.0
    %437 = vmatpush1.msra.mxu0 0.0
    %438 = vmatprep.subr.mxu0 0.0
    %439 = vmatpush1.msra.mxu0 0.0
    %440 = vmatprep.subr.mxu0 0.0
    %441 = vmatpush1.msra.mxu0 0.0
    %442 = vmatprep.subr.mxu0 0.0
    %443 = vmatpush1.msra.mxu0 0.0
    %444 = vmatprep.subr.mxu0 0.0
    %445 = vmatpush1.msra.mxu0 0.0
    %446 = vmatprep.subr.mxu0 0.0
    %447 = vmatpush1.msra.mxu0 0.0
    %448 = vmatprep.subr.mxu0 0.0
    %449 = vmatpush1.msra.mxu0 0.0
    %450 = vmatprep.subr.mxu0 0.0
    %451 = vmatpush1.msra.mxu0 0.0
    %452 = vmatprep.subr.mxu0 0.0
    %453 = vmatpush1.msra.mxu0 0.0
    %454 = vmatprep.subr.mxu0 0.0
    %455 = vmatpush1.msra.mxu0 0.0
    %456 = vmatprep.subr.mxu0 0.0
    %457 = vmatpush1.msra.mxu0 0.0
    %458 = vmatprep.subr.mxu0 0.0
    %459 = vmatpush1.msra.mxu0 0.0
    %460 = vmatprep.subr.mxu0 0.0
    %461 = vmatpush1.msra.mxu0 0.0
    %462 = vmatprep.mubr.f32.mxu0 0.0
    %463 = vmatmul.mubr.f32.gmra.mrb[0].mxu0 %v375
    %v464 = vpop.f32.mrb[0].mxu0
    %v465 = vadd.f32 0.0, %v464
    %v466 = vpop.f32.mrb[0].mxu0
    %467 = vmatprep.mubr.f32.mxu0 0.0
    %468 = vmatmul.mubr.f32.gmra.mrb[0].mxu0 %v378
    %v469 = vpop.f32.mrb[0].mxu0
    %v470 = vadd.f32 0.0, %v469
    %v471 = vpop.f32.mrb[0].mxu0
    %472 = vmatprep.mubr.f32.mxu0 0.0
    %473 = vmatmul.mubr.f32.gmra.mrb[0].mxu0 %v381
    %v474 = vpop.f32.mrb[0].mxu0
    %v475 = vadd.f32 0.0, %v474
    %v476 = vpop.f32.mrb[0].mxu0
    %477 = vmatprep.mubr.f32.mxu0 0.0
    %478 = vmatmul.mubr.f32.gmra.mrb[0].mxu0 %v384
    %v479 = vpop.f32.mrb[0].mxu0
    %v480 = vadd.f32 0.0, %v479
    %v481 = vpop.f32.mrb[0].mxu0
    %482 = vmatprep.mubr.f32.mxu0 0.0
    %483 = vmatmul.mubr.f32.gmra.mrb[0].mxu0 %v387
    %v484 = vpop.f32.mrb[0].mxu0
    %v485 = vadd.f32 0.0, %v484
    %v486 = vpop.f32.mrb[0].mxu0
    %487 = vmatprep.mubr.f32.mxu0 0.0
    %488 = vmatmul.mubr.f32.gmra.mrb[0].mxu0 %v390
    %v489 = vpop.f32.mrb[0].mxu0
    %v490 = vadd.f32 0.0, %v489
    %v491 = vpop.f32.mrb[0].mxu0
    %492 = vmatprep.mubr.f32.mxu0 0.0
    %493 = vmatmul.mubr.f32.gmra.mrb[0].mxu0 %v393
    %v494 = vpop.f32.mrb[0].mxu0
    %v495 = vadd.f32 0.0, %v494
    %v496 = vpop.f32.mrb[0].mxu0
    %497 = vmatprep.mubr.f32.mxu0 0.0
    %498 = vmatmul.mubr.f32.gmra.mrb[0].mxu0 %v396
    %v499 = vpop.f32.mrb[0].mxu0
    %v500 = vadd.f32 0.0, %v499
    %v501 = vpop.f32.mrb[0].mxu0
    %502 = vdwg.mxu0
    %503 = vmatprep.subr.mxu0 0.0
    %504 = vmatpush1.msra.mxu0 %v48
    %505 = vmatprep.subr.mxu0 0.0
    %506 = vmatpush1.msra.mxu0 %v49
    %507 = vmatprep.subr.mxu0 0.0
    %508 = vmatpush1.msra.mxu0 %v50
    %509 = vmatprep.subr.mxu0 0.0
    %510 = vmatpush1.msra.mxu0 %v51
    %511 = vmatprep.subr.mxu0 0.0
    %512 = vmatpush1.msra.mxu0 %v52
    %513 = vmatprep.subr.mxu0 0.0
    %514 = vmatpush1.msra.mxu0 %v53
    %515 = vmatprep.subr.mxu0 0.0
    %516 = vmatpush1.msra.mxu0 %v54
    %517 = vmatprep.subr.mxu0 0.0
    %518 = vmatpush1.msra.mxu0 %v55
    %519 = vmatprep.subr.mxu0 0.0
    %520 = vmatpush1.msra.mxu0 %v56
    %521 = vmatprep.subr.mxu0 0.0
    %522 = vmatpush1.msra.mxu0 %v57
    %523 = vmatprep.subr.mxu0 0.0
    %524 = vmatpush1.msra.mxu0 %v58
    %525 = vmatprep.subr.mxu0 0.0
    %526 = vmatpush1.msra.mxu0 %v59
    %527 = vmatprep.subr.mxu0 0.0
    %528 = vmatpush1.msra.mxu0 %v60
    %529 = vmatprep.subr.mxu0 0.0
    %530 = vmatpush1.msra.mxu0 %v61
    %531 = vmatprep.subr.mxu0 0.0
    %532 = vmatpush1.msra.mxu0 %v62
    %533 = vmatprep.subr.mxu0 0.0
    %534 = vmatpush1.msra.mxu0 %v63
    %535 = vmatprep.subr.mxu0 0.0
    %536 = vmatpush1.msra.mxu0 0.0
    %537 = vmatprep.subr.mxu0 0.0
    %538 = vmatpush1.msra.mxu0 0.0
    %539 = vmatprep.subr.mxu0 0.0
    %540 = vmatpush1.msra.mxu0 0.0
    %541 = vmatprep.subr.mxu0 0.0
    %542 = vmatpush1.msra.mxu0 0.0
    %543 = vmatprep.subr.mxu0 0.0
    %544 = vmatpush1.msra.mxu0 0.0
    %545 = vmatprep.subr.mxu0 0.0
    %546 = vmatpush1.msra.mxu0 0.0
    %547 = vmatprep.subr.mxu0 0.0
    %548 = vmatpush1.msra.mxu0 0.0
    %549 = vmatprep.subr.mxu0 0.0
    %550 = vmatpush1.msra.mxu0 0.0
    %551 = vmatprep.subr.mxu0 0.0
    %552 = vmatpush1.msra.mxu0 0.0
    %553 = vmatprep.subr.mxu0 0.0
    %554 = vmatpush1.msra.mxu0 0.0
    %555 = vmatprep.subr.mxu0 0.0
    %556 = vmatpush1.msra.mxu0 0.0
    %557 = vmatprep.subr.mxu0 0.0
    %558 = vmatpush1.msra.mxu0 0.0
    %559 = vmatprep.subr.mxu0 0.0
    %560 = vmatpush1.msra.mxu0 0.0
    %561 = vmatprep.subr.mxu0 0.0
    %562 = vmatpush1.msra.mxu0 0.0
    %563 = vmatprep.subr.mxu0 0.0
    %564 = vmatpush1.msra.mxu0 0.0
    %565 = vmatprep.subr.mxu0 0.0
    %566 = vmatpush1.msra.mxu0 0.0
    %567 = vmatprep.mubr.f32.mxu0 0.0
    %568 = vmatmul.mubr.f32.gmra.mrb[0].mxu0 %v307
    %v569 = vpop.f32.mrb[0].mxu0
    %v570 = vadd.f32 0.0, %v569
    %v571 = vpop.f32.mrb[0].mxu0
    %572 = vmatprep.mubr.f32.mxu0 0.0
    %573 = vmatmul.mubr.f32.gmra.mrb[0].mxu0 %v312
    %v574 = vpop.f32.mrb[0].mxu0
    %v575 = vadd.f32 0.0, %v574
    %v576 = vpop.f32.mrb[0].mxu0
    %577 = vmatprep.mubr.f32.mxu0 0.0
    %578 = vmatmul.mubr.f32.gmra.mrb[0].mxu0 %v317
    %v579 = vpop.f32.mrb[0].mxu0
    %v580 = vadd.f32 0.0, %v579
    %v581 = vpop.f32.mrb[0].mxu0
    %582 = vmatprep.mubr.f32.mxu0 0.0
    %583 = vmatmul.mubr.f32.gmra.mrb[0].mxu0 %v322
    %v584 = vpop.f32.mrb[0].mxu0
    %v585 = vadd.f32 0.0, %v584
    %v586 = vpop.f32.mrb[0].mxu0
    %587 = vdwg.mxu0
    %588 = vset.pattern.permute.xlu0 3
    %589 = vperm.xlu0 %588, %v181
    %v590 = vpop.permute.xlu0 %589
    %591 = vset.pattern.permute.xlu0 3
    %592 = vperm.xlu0 %591, %v182
    %v593 = vpop.permute.xlu0 %592
    %594 = vset.pattern.permute.xlu0 3
    %595 = vperm.xlu0 %594, %v183
    %v596 = vpop.permute.xlu0 %595
    %597 = vset.pattern.permute.xlu0 3
    %598 = vperm.xlu0 %597, %v184
    %v599 = vpop.permute.xlu0 %598
    %600 = vset.pattern.permute.xlu0 3
    %601 = vperm.xlu0 %600, %v185
    %v602 = vpop.permute.xlu0 %601
    %603 = vset.pattern.permute.xlu0 3
    %604 = vperm.xlu0 %603, %v186
    %v605 = vpop.permute.xlu0 %604
    %606 = vset.pattern.permute.xlu0 3
    %607 = vperm.xlu0 %606, %v187
    %v608 = vpop.permute.xlu0 %607
    %609 = vset.pattern.permute.xlu0 3
    %610 = vperm.xlu0 %609, %v188
    %v611 = vpop.permute.xlu0 %610
    %vm612 = vcmp.eq.s32.totalorder %v191, %v590
    %vm613 = vcmp.eq.s32.totalorder %v191, %v593
    %vm614 = vcmp.eq.s32.totalorder %v191, %v596
    %vm615 = vcmp.eq.s32.totalorder %v191, %v599
    %vm616 = vcmp.eq.s32.totalorder %v191, %v602
    %vm617 = vcmp.eq.s32.totalorder %v191, %v605
    %vm618 = vcmp.eq.s32.totalorder %v191, %v608
    %vm619 = vcmp.eq.s32.totalorder %v191, %v611
    %v620 = vsel %vm612, 1, 0
    %v621 = vsel %vm613, 1, 0
    %v622 = vsel %vm614, 1, 0
    %v623 = vsel %vm615, 1, 0
    %v624 = vsel %vm616, 1, 0
    %v625 = vsel %vm617, 1, 0
    %v626 = vsel %vm618, 1, 0
    %v627 = vsel %vm619, 1, 0
    %v628 = vcvt.s32.f32 %v620
    %v629 = vcvt.s32.f32 %v621
    %v630 = vcvt.s32.f32 %v622
    %v631 = vcvt.s32.f32 %v623
    %v632 = vcvt.s32.f32 %v624
    %v633 = vcvt.s32.f32 %v625
    %v634 = vcvt.s32.f32 %v626
    %v635 = vcvt.s32.f32 %v627
    %636 = vmatprep.subr.mxu0 0.0
    %637 = vmatpush1.msra.mxu0 %v64
    %638 = vmatprep.subr.mxu0 0.0
    %639 = vmatpush1.msra.mxu0 %v65
    %640 = vmatprep.subr.mxu0 0.0
    %641 = vmatpush1.msra.mxu0 %v66
    %642 = vmatprep.subr.mxu0 0.0
    %643 = vmatpush1.msra.mxu0 %v67
    %644 = vmatprep.subr.mxu0 0.0
    %645 = vmatpush1.msra.mxu0 %v68
    %646 = vmatprep.subr.mxu0 0.0
    %647 = vmatpush1.msra.mxu0 %v69
    %648 = vmatprep.subr.mxu0 0.0
    %649 = vmatpush1.msra.mxu0 %v70
    %650 = vmatprep.subr.mxu0 0.0
    %651 = vmatpush1.msra.mxu0 %v71
    %652 = vmatprep.subr.mxu0 0.0
    %653 = vmatpush1.msra.mxu0 %v72
    %654 = vmatprep.subr.mxu0 0.0
    %655 = vmatpush1.msra.mxu0 %v73
    %656 = vmatprep.subr.mxu0 0.0
    %657 = vmatpush1.msra.mxu0 %v74
    %658 = vmatprep.subr.mxu0 0.0
    %659 = vmatpush1.msra.mxu0 %v75
    %660 = vmatprep.subr.mxu0 0.0
    %661 = vmatpush1.msra.mxu0 %v76
    %662 = vmatprep.subr.mxu0 0.0
    %663 = vmatpush1.msra.mxu0 %v77
    %664 = vmatprep.subr.mxu0 0.0
    %665 = vmatpush1.msra.mxu0 %v78
    %666 = vmatprep.subr.mxu0 0.0
    %667 = vmatpush1.msra.mxu0 %v79
    %668 = vmatprep.subr.mxu0 0.0
    %669 = vmatpush1.msra.mxu0 0.0
    %670 = vmatprep.subr.mxu0 0.0
    %671 = vmatpush1.msra.mxu0 0.0
    %672 = vmatprep.subr.mxu0 0.0
    %673 = vmatpush1.msra.mxu0 0.0
    %674 = vmatprep.subr.mxu0 0.0
    %675 = vmatpush1.msra.mxu0 0.0
    %676 = vmatprep.subr.mxu0 0.0
    %677 = vmatpush1.msra.mxu0 0.0
    %678 = vmatprep.subr.mxu0 0.0
    %679 = vmatpush1.msra.mxu0 0.0
    %680 = vmatprep.subr.mxu0 0.0
    %681 = vmatpush1.msra.mxu0 0.0
    %682 = vmatprep.subr.mxu0 0.0
    %683 = vmatpush1.msra.mxu0 0.0
    %684 = vmatprep.subr.mxu0 0.0
    %685 = vmatpush1.msra.mxu0 0.0
    %686 = vmatprep.subr.mxu0 0.0
    %687 = vmatpush1.msra.mxu0 0.0
    %688 = vmatprep.subr.mxu0 0.0
    %689 = vmatpush1.msra.mxu0 0.0
    %690 = vmatprep.subr.mxu0 0.0
    %691 = vmatpush1.msra.mxu0 0.0
    %692 = vmatprep.subr.mxu0 0.0
    %693 = vmatpush1.msra.mxu0 0.0
    %694 = vmatprep.subr.mxu0 0.0
    %695 = vmatpush1.msra.mxu0 0.0
    %696 = vmatprep.subr.mxu0 0.0
    %697 = vmatpush1.msra.mxu0 0.0
    %698 = vmatprep.subr.mxu0 0.0
    %699 = vmatpush1.msra.mxu0 0.0
    %700 = vmatprep.mubr.f32.mxu0 0.0
    %701 = vmatmul.mubr.f32.gmra.mrb[0].mxu0 %v465
    %v702 = vpop.f32.mrb[0].mxu0
    %v703 = vadd.f32 0.0, %v702
    %v704 = vpop.f32.mrb[0].mxu0
    %705 = vmatprep.mubr.f32.mxu0 0.0
    %706 = vmatmul.mubr.f32.gmra.mrb[0].mxu0 %v470
    %v707 = vpop.f32.mrb[0].mxu0
    %v708 = vadd.f32 0.0, %v707
    %v709 = vpop.f32.mrb[0].mxu0
    %710 = vmatprep.mubr.f32.mxu0 0.0
    %711 = vmatmul.mubr.f32.gmra.mrb[0].mxu0 %v475
    %v712 = vpop.f32.mrb[0].mxu0
    %v713 = vadd.f32 0.0, %v712
    %v714 = vpop.f32.mrb[0].mxu0
    %715 = vmatprep.mubr.f32.mxu0 0.0
    %716 = vmatmul.mubr.f32.gmra.mrb[0].mxu0 %v480
    %v717 = vpop.f32.mrb[0].mxu0
    %v718 = vadd.f32 0.0, %v717
    %v719 = vpop.f32.mrb[0].mxu0
    %720 = vmatprep.mubr.f32.mxu0 0.0
    %721 = vmatmul.mubr.f32.gmra.mrb[0].mxu0 %v485
    %v722 = vpop.f32.mrb[0].mxu0
    %v723 = vadd.f32 0.0, %v722
    %v724 = vpop.f32.mrb[0].mxu0
    %725 = vmatprep.mubr.f32.mxu0 0.0
    %726 = vmatmul.mubr.f32.gmra.mrb[0].mxu0 %v490
    %v727 = vpop.f32.mrb[0].mxu0
    %v728 = vadd.f32 0.0, %v727
    %v729 = vpop.f32.mrb[0].mxu0
    %730 = vmatprep.mubr.f32.mxu0 0.0
    %731 = vmatmul.mubr.f32.gmra.mrb[0].mxu0 %v495
    %v732 = vpop.f32.mrb[0].mxu0
    %v733 = vadd.f32 0.0, %v732
    %v734 = vpop.f32.mrb[0].mxu0
    %735 = vmatprep.mubr.f32.mxu0 0.0
    %736 = vmatmul.mubr.f32.gmra.mrb[0].mxu0 %v500
    %v737 = vpop.f32.mrb[0].mxu0
    %v738 = vadd.f32 0.0, %v737
    %v739 = vpop.f32.mrb[0].mxu0
    %740 = vdwg.mxu0
    %vm741 = vcmask 261120
    %v743 = vsel %vm741, %v628, 0
    %v746 = vsel %vm741, %v629, 0
    %v749 = vsel %vm741, %v630, 0
    %v752 = vsel %vm741, %v631, 0
    %v755 = vsel %vm741, %v632, 0
    %v758 = vsel %vm741, %v633, 0
    %v761 = vsel %vm741, %v634, 0
    %v764 = vsel %vm741, %v635, 0
    %766 = vmatprep.subr.mxu0 0.0
    %767 = vmatpush1.msra.mxu0 %v570
    %768 = vmatprep.subr.mxu0 0.0
    %769 = vmatpush1.msra.mxu0 %v575
    %770 = vmatprep.subr.mxu0 0.0
    %771 = vmatpush1.msra.mxu0 %v580
    %772 = vmatprep.subr.mxu0 0.0
    %773 = vmatpush1.msra.mxu0 %v585
    %774 = vmatprep.subr.mxu0 0.0
    %775 = vmatpush1.msra.mxu0 0.0
    %776 = vmatprep.subr.mxu0 0.0
    %777 = vmatpush1.msra.mxu0 0.0
    %778 = vmatprep.subr.mxu0 0.0
    %779 = vmatpush1.msra.mxu0 0.0
    %780 = vmatprep.subr.mxu0 0.0
    %781 = vmatpush1.msra.mxu0 0.0
    %782 = vmatprep.subr.mxu0 0.0
    %783 = vmatpush1.msra.mxu0 0.0
    %784 = vmatprep.subr.mxu0 0.0
    %785 = vmatpush1.msra.mxu0 0.0
    %786 = vmatprep.subr.mxu0 0.0
    %787 = vmatpush1.msra.mxu0 0.0
    %788 = vmatprep.subr.mxu0 0.0
    %789 = vmatpush1.msra.mxu0 0.0
    %790 = vmatprep.subr.mxu0 0.0
    %791 = vmatpush1.msra.mxu0 0.0
    %792 = vmatprep.subr.mxu0 0.0
    %793 = vmatpush1.msra.mxu0 0.0
    %794 = vmatprep.subr.mxu0 0.0
    %795 = vmatpush1.msra.mxu0 0.0
    %796 = vmatprep.subr.mxu0 0.0
    %797 = vmatpush1.msra.mxu0 0.0
    %798 = vmatprep.subr.mxu0 0.0
    %799 = vmatpush1.msra.mxu0 0.0
    %800 = vmatprep.subr.mxu0 0.0
    %801 = vmatpush1.msra.mxu0 0.0
    %802 = vmatprep.subr.mxu0 0.0
    %803 = vmatpush1.msra.mxu0 0.0
    %804 = vmatprep.subr.mxu0 0.0
    %805 = vmatpush1.msra.mxu0 0.0
    %806 = vmatprep.subr.mxu0 0.0
    %807 = vmatpush1.msra.mxu0 0.0
    %808 = vmatprep.subr.mxu0 0.0
    %809 = vmatpush1.msra.mxu0 0.0
    %810 = vmatprep.subr.mxu0 0.0
    %811 = vmatpush1.msra.mxu0 0.0
    %812 = vmatprep.subr.mxu0 0.0
    %813 = vmatpush1.msra.mxu0 0.0
    %814 = vmatprep.subr.mxu0 0.0
    %815 = vmatpush1.msra.mxu0 0.0
    %816 = vmatprep.subr.mxu0 0.0
    %817 = vmatpush1.msra.mxu0 0.0
    %818 = vmatprep.subr.mxu0 0.0
    %819 = vmatpush1.msra.mxu0 0.0
    %820 = vmatprep.subr.mxu0 0.0
    %821 = vmatpush1.msra.mxu0 0.0
    %822 = vmatprep.subr.mxu0 0.0
    %823 = vmatpush1.msra.mxu0 0.0
    %824 = vmatprep.subr.mxu0 0.0
    %825 = vmatpush1.msra.mxu0 0.0
    %826 = vmatprep.subr.mxu0 0.0
    %827 = vmatpush1.msra.mxu0 0.0
    %828 = vmatprep.subr.mxu0 0.0
    %829 = vmatpush1.msra.mxu0 0.0
    %830 = vmatprep.mubr.f32.mxu0 0.0
    %831 = vmatmul.mubr.f32.gmra.mrb[0].mxu0 %v743
    %v832 = vpop.f32.mrb[0].mxu0
    %v833 = vadd.f32 %v703, %v832
    %v834 = vpop.f32.mrb[0].mxu0
    %835 = vmatprep.mubr.f32.mxu0 0.0
    %836 = vmatmul.mubr.f32.gmra.mrb[0].mxu0 %v746
    %v837 = vpop.f32.mrb[0].mxu0
    %v838 = vadd.f32 %v708, %v837
    %v839 = vpop.f32.mrb[0].mxu0
    %840 = vmatprep.mubr.f32.mxu0 0.0
    %841 = vmatmul.mubr.f32.gmra.mrb[0].mxu0 %v749
    %v842 = vpop.f32.mrb[0].mxu0
    %v843 = vadd.f32 %v713, %v842
    %v844 = vpop.f32.mrb[0].mxu0
    %845 = vmatprep.mubr.f32.mxu0 0.0
    %846 = vmatmul.mubr.f32.gmra.mrb[0].mxu0 %v752
    %v847 = vpop.f32.mrb[0].mxu0
    %v848 = vadd.f32 %v718, %v847
    %v849 = vpop.f32.mrb[0].mxu0
    %850 = vmatprep.mubr.f32.mxu0 0.0
    %851 = vmatmul.mubr.f32.gmra.mrb[0].mxu0 %v755
    %v852 = vpop.f32.mrb[0].mxu0
    %v853 = vadd.f32 %v723, %v852
    %v854 = vpop.f32.mrb[0].mxu0
    %855 = vmatprep.mubr.f32.mxu0 0.0
    %856 = vmatmul.mubr.f32.gmra.mrb[0].mxu0 %v758
    %v857 = vpop.f32.mrb[0].mxu0
    %v858 = vadd.f32 %v728, %v857
    %v859 = vpop.f32.mrb[0].mxu0
    %860 = vmatprep.mubr.f32.mxu0 0.0
    %861 = vmatmul.mubr.f32.gmra.mrb[0].mxu0 %v761
    %v862 = vpop.f32.mrb[0].mxu0
    %v863 = vadd.f32 %v733, %v862
    %v864 = vpop.f32.mrb[0].mxu0
    %865 = vmatprep.mubr.f32.mxu0 0.0
    %866 = vmatmul.mubr.f32.gmra.mrb[0].mxu0 %v764
    %v867 = vpop.f32.mrb[0].mxu0
    %v868 = vadd.f32 %v738, %v867
    %v869 = vpop.f32.mrb[0].mxu0
    %870 = vdwg.mxu0
    %v871 = vlaneseq
    %v872 = vshrl.u32 %v871, 7
    %v873 = vsub.s32 0, %v872
    %v874 = vrot.slane %v80, %v873
    %v875 = vadd.f32 %v833, %v874
    %v876 = vadd.f32 %v838, %v874
    %v877 = vadd.f32 %v843, %v874
    %v878 = vadd.f32 %v848, %v874
    %v879 = vadd.f32 %v853, %v874
    %v880 = vadd.f32 %v858, %v874
    %v881 = vadd.f32 %v863, %v874
    %v882 = vadd.f32 %v868, %v874
    %v883 = vmax.f32 %v875, 0.0
    %v884 = vmax.f32 %v876, 0.0
    %v885 = vmax.f32 %v877, 0.0
    %v886 = vmax.f32 %v878, 0.0
    %v887 = vmax.f32 %v879, 0.0
    %v888 = vmax.f32 %v880, 0.0
    %v889 = vmax.f32 %v881, 0.0
    %v890 = vmax.f32 %v882, 0.0
    %v891 = vlaneseq
    %v892 = vshrl.u32 %v891, 7
    %v893 = vadd.s32 %v892, 8
    %v894 = vadd.s32 %v892, 16
    %v895 = vadd.s32 %v892, 24
    %v896 = vlaneseq
    %v897 = vshrl.u32 %v896, 7
    %v898 = vsub.s32 0, %v897
    %v899 = vrot.slane %v189, %v898
    %vm900 = vcmp.eq.s32.totalorder %v892, %v899
    %vm901 = vcmp.eq.s32.totalorder %v893, %v899
    %vm902 = vcmp.eq.s32.totalorder %v894, %v899
    %vm903 = vcmp.eq.s32.totalorder %v895, %v899
    %v904 = vsel %vm900, 1, 0
    %v905 = vsel %vm901, 1, 0
    %v906 = vsel %vm902, 1, 0
    %v907 = vsel %vm903, 1, 0
    %v908 = vcvt.s32.f32 %v904
    %v909 = vcvt.s32.f32 %v905
    %v910 = vcvt.s32.f32 %v906
    %v911 = vcvt.s32.f32 %v907
    %vm912 = vcmask 523264
    %v914 = vsel %vm912, %v908, 0
    %v917 = vsel %vm912, %v909, 0
    %v920 = vsel %vm912, %v910, 0
    %v923 = vsel %vm912, %v911, 0
    %925 = vmatprep.subr.mxu0 0.0
    %926 = vmatpush1.msra.mxu0 %v883
    %927 = vmatprep.subr.mxu0 0.0
    %928 = vmatpush1.msra.mxu0 %v884
    %929 = vmatprep.subr.mxu0 0.0
    %930 = vmatpush1.msra.mxu0 %v885
    %931 = vmatprep.subr.mxu0 0.0
    %932 = vmatpush1.msra.mxu0 %v886
    %933 = vmatprep.subr.mxu0 0.0
    %934 = vmatpush1.msra.mxu0 %v887
    %935 = vmatprep.subr.mxu0 0.0
    %936 = vmatpush1.msra.mxu0 %v888
    %937 = vmatprep.subr.mxu0 0.0
    %938 = vmatpush1.msra.mxu0 %v889
    %939 = vmatprep.subr.mxu0 0.0
    %940 = vmatpush1.msra.mxu0 %v890
    %941 = vmatprep.subr.mxu0 0.0
    %942 = vmatpush1.msra.mxu0 0.0
    %943 = vmatprep.subr.mxu0 0.0
    %944 = vmatpush1.msra.mxu0 0.0
    %945 = vmatprep.subr.mxu0 0.0
    %946 = vmatpush1.msra.mxu0 0.0
    %947 = vmatprep.subr.mxu0 0.0
    %948 = vmatpush1.msra.mxu0 0.0
    %949 = vmatprep.subr.mxu0 0.0
    %950 = vmatpush1.msra.mxu0 0.0
    %951 = vmatprep.subr.mxu0 0.0
    %952 = vmatpush1.msra.mxu0 0.0
    %953 = vmatprep.subr.mxu0 0.0
    %954 = vmatpush1.msra.mxu0 0.0
    %955 = vmatprep.subr.mxu0 0.0
    %956 = vmatpush1.msra.mxu0 0.0
    %957 = vmatprep.subr.mxu0 0.0
    %958 = vmatpush1.msra.mxu0 0.0
    %959 = vmatprep.subr.mxu0 0.0
    %960 = vmatpush1.msra.mxu0 0.0
    %961 = vmatprep.subr.mxu0 0.0
    %962 = vmatpush1.msra.mxu0 0.0
    %963 = vmatprep.subr.mxu0 0.0
    %964 = vmatpush1.msra.mxu0 0.0
    %965 = vmatprep.subr.mxu0 0.0
    %966 = vmatpush1.msra.mxu0 0.0
    %967 = vmatprep.subr.mxu0 0.0
    %968 = vmatpush1.msra.mxu0 0.0
    %969 = vmatprep.subr.mxu0 0.0
    %970 = vmatpush1.msra.mxu0 0.0
    %971 = vmatprep.subr.mxu0 0.0
    %972 = vmatpush1.msra.mxu0 0.0
    %973 = vmatprep.subr.mxu0 0.0
    %974 = vmatpush1.msra.mxu0 0.0
    %975 = vmatprep.subr.mxu0 0.0
    %976 = vmatpush1.msra.mxu0 0.0
    %977 = vmatprep.subr.mxu0 0.0
    %978 = vmatpush1.msra.mxu0 0.0
    %979 = vmatprep.subr.mxu0 0.0
    %980 = vmatpush1.msra.mxu0 0.0
    %981 = vmatprep.subr.mxu0 0.0
    %982 = vmatpush1.msra.mxu0 0.0
    %983 = vmatprep.subr.mxu0 0.0
    %984 = vmatpush1.msra.mxu0 0.0
    %985 = vmatprep.subr.mxu0 0.0
    %986 = vmatpush1.msra.mxu0 0.0
    %987 = vmatprep.subr.mxu0 0.0
    %988 = vmatpush1.msra.mxu0 0.0
    %989 = vmatprep.mubr.f32.mxu0 0.0
    %990 = vmatmul.mubr.f32.gmra.mrb[0].mxu0 %v914
    %v991 = vpop.f32.mrb[0].mxu0
    %v992 = vadd.f32 0.0, %v991
    %v993 = vpop.f32.mrb[0].mxu0
    %994 = vmatprep.mubr.f32.mxu0 0.0
    %995 = vmatmul.mubr.f32.gmra.mrb[0].mxu0 %v917
    %v996 = vpop.f32.mrb[0].mxu0
    %v997 = vadd.f32 0.0, %v996
    %v998 = vpop.f32.mrb[0].mxu0
    %999 = vmatprep.mubr.f32.mxu0 0.0
    %1000 = vmatmul.mubr.f32.gmra.mrb[0].mxu0 %v920
    %v1001 = vpop.f32.mrb[0].mxu0
    %v1002 = vadd.f32 0.0, %v1001
    %v1003 = vpop.f32.mrb[0].mxu0
    %1004 = vmatprep.mubr.f32.mxu0 0.0
    %1005 = vmatmul.mubr.f32.gmra.mrb[0].mxu0 %v923
    %v1006 = vpop.f32.mrb[0].mxu0
    %v1007 = vadd.f32 0.0, %v1006
    %v1008 = vpop.f32.mrb[0].mxu0
    %1009 = vdwg.mxu0
    %1010 = vmatprep.subr.mxu0 %v148
    %1011 = vmatpush1.msra.mxu0 %v147
    %1012 = vmatprep.subr.mxu0 %v150
    %1013 = vmatpush1.msra.mxu0 %v149
    %1014 = vmatprep.subr.mxu0 %v152
    %1015 = vmatpush1.msra.mxu0 %v151
    %1016 = vmatprep.subr.mxu0 %v154
    %1017 = vmatpush1.msra.mxu0 %v153
    %1018 = vmatprep.subr.mxu0 %v156
    %1019 = vmatpush1.msra.mxu0 %v155
    %1020 = vmatprep.subr.mxu0 %v158
    %1021 = vmatpush1.msra.mxu0 %v157
    %1022 = vmatprep.subr.mxu0 %v160
    %1023 = vmatpush1.msra.mxu0 %v159
    %1024 = vmatprep.subr.mxu0 %v162
    %1025 = vmatpush1.msra.mxu0 %v161
    %1026 = vmatprep.subr.mxu0 %v164
    %1027 = vmatpush1.msra.mxu0 %v163
    %1028 = vmatprep.subr.mxu0 %v166
    %1029 = vmatpush1.msra.mxu0 %v165
    %1030 = vmatprep.subr.mxu0 %v168
    %1031 = vmatpush1.msra.mxu0 %v167
    %1032 = vmatprep.subr.mxu0 %v170
    %1033 = vmatpush1.msra.mxu0 %v169
    %1034 = vmatprep.subr.mxu0 %v172
    %1035 = vmatpush1.msra.mxu0 %v171
    %1036 = vmatprep.subr.mxu0 %v174
    %1037 = vmatpush1.msra.mxu0 %v173
    %1038 = vmatprep.subr.mxu0 %v176
    %1039 = vmatpush1.msra.mxu0 %v175
    %1040 = vmatprep.subr.mxu0 %v178
    %1041 = vmatpush1.msra.mxu0 %v177
    %1042 = vmatprep.subr.mxu0 0.0
    %1043 = vmatpush1.msra.mxu0 0.0
    %1044 = vmatprep.subr.mxu0 0.0
    %1045 = vmatpush1.msra.mxu0 0.0
    %1046 = vmatprep.subr.mxu0 0.0
    %1047 = vmatpush1.msra.mxu0 0.0
    %1048 = vmatprep.subr.mxu0 0.0
    %1049 = vmatpush1.msra.mxu0 0.0
    %1050 = vmatprep.subr.mxu0 0.0
    %1051 = vmatpush1.msra.mxu0 0.0
    %1052 = vmatprep.subr.mxu0 0.0
    %1053 = vmatpush1.msra.mxu0 0.0
    %1054 = vmatprep.subr.mxu0 0.0
    %1055 = vmatpush1.msra.mxu0 0.0
    %1056 = vmatprep.subr.mxu0 0.0
    %1057 = vmatpush1.msra.mxu0 0.0
    %1058 = vmatprep.subr.mxu0 0.0
    %1059 = vmatpush1.msra.mxu0 0.0
    %1060 = vmatprep.subr.mxu0 0.0
    %1061 = vmatpush1.msra.mxu0 0.0
    %1062 = vmatprep.subr.mxu0 0.0
    %1063 = vmatpush1.msra.mxu0 0.0
    %1064 = vmatprep.subr.mxu0 0.0
    %1065 = vmatpush1.msra.mxu0 0.0
    %1066 = vmatprep.subr.mxu0 0.0
    %1067 = vmatpush1.msra.mxu0 0.0
    %1068 = vmatprep.subr.mxu0 0.0
    %1069 = vmatpush1.msra.mxu0 0.0
    %1070 = vmatprep.subr.mxu0 0.0
    %1071 = vmatpush1.msra.mxu0 0.0
    %1072 = vmatprep.subr.mxu0 0.0
    %1073 = vmatpush1.msra.mxu0 0.0
    %1074 = vmatprep.mubr.f32.mxu0 0.0
    %1075 = vmatmul.mubr.f32.gmra.mrb[0].mxu0 %v992
    %v1076 = vpop.f32.mrb[0].mxu0
    %v1077 = vadd.f32 0.0, %v1076
    %v1078 = vpop.f32.mrb[0].mxu0
    %v1079 = vadd.f32 0.0, %v1078
    %1080 = vmatprep.mubr.f32.mxu0 0.0
    %1081 = vmatmul.mubr.f32.gmra.mrb[0].mxu0 %v997
    %v1082 = vpop.f32.mrb[0].mxu0
    %v1083 = vadd.f32 0.0, %v1082
    %v1084 = vpop.f32.mrb[0].mxu0
    %v1085 = vadd.f32 0.0, %v1084
    %1086 = vmatprep.mubr.f32.mxu0 0.0
    %1087 = vmatmul.mubr.f32.gmra.mrb[0].mxu0 %v1002
    %v1088 = vpop.f32.mrb[0].mxu0
    %v1089 = vadd.f32 0.0, %v1088
    %v1090 = vpop.f32.mrb[0].mxu0
    %v1091 = vadd.f32 0.0, %v1090
    %1092 = vmatprep.mubr.f32.mxu0 0.0
    %1093 = vmatmul.mubr.f32.gmra.mrb[0].mxu0 %v1007
    %v1094 = vpop.f32.mrb[0].mxu0
    %v1095 = vadd.f32 0.0, %v1094
    %v1096 = vpop.f32.mrb[0].mxu0
    %v1097 = vadd.f32 0.0, %v1096
    %1098 = vdwg.mxu0
    %1099 = vmatprep.subr.mxu0 %v116
    %1100 = vmatpush1.msra.mxu0 %v115
    %1101 = vmatprep.subr.mxu0 %v118
    %1102 = vmatpush1.msra.mxu0 %v117
    %1103 = vmatprep.subr.mxu0 %v120
    %1104 = vmatpush1.msra.mxu0 %v119
    %1105 = vmatprep.subr.mxu0 %v122
    %1106 = vmatpush1.msra.mxu0 %v121
    %1107 = vmatprep.subr.mxu0 %v124
    %1108 = vmatpush1.msra.mxu0 %v123
    %1109 = vmatprep.subr.mxu0 %v126
    %1110 = vmatpush1.msra.mxu0 %v125
    %1111 = vmatprep.subr.mxu0 %v128
    %1112 = vmatpush1.msra.mxu0 %v127
    %1113 = vmatprep.subr.mxu0 %v130
    %1114 = vmatpush1.msra.mxu0 %v129
    %1115 = vmatprep.subr.mxu0 %v132
    %1116 = vmatpush1.msra.mxu0 %v131
    %1117 = vmatprep.subr.mxu0 %v134
    %1118 = vmatpush1.msra.mxu0 %v133
    %1119 = vmatprep.subr.mxu0 %v136
    %1120 = vmatpush1.msra.mxu0 %v135
    %1121 = vmatprep.subr.mxu0 %v138
    %1122 = vmatpush1.msra.mxu0 %v137
    %1123 = vmatprep.subr.mxu0 %v140
    %1124 = vmatpush1.msra.mxu0 %v139
    %1125 = vmatprep.subr.mxu0 %v142
    %1126 = vmatpush1.msra.mxu0 %v141
    %1127 = vmatprep.subr.mxu0 %v144
    %1128 = vmatpush1.msra.mxu0 %v143
    %1129 = vmatprep.subr.mxu0 %v146
    %1130 = vmatpush1.msra.mxu0 %v145
    %1131 = vmatprep.subr.mxu0 0.0
    %1132 = vmatpush1.msra.mxu0 0.0
    %1133 = vmatprep.subr.mxu0 0.0
    %1134 = vmatpush1.msra.mxu0 0.0
    %1135 = vmatprep.subr.mxu0 0.0
    %1136 = vmatpush1.msra.mxu0 0.0
    %1137 = vmatprep.subr.mxu0 0.0
    %1138 = vmatpush1.msra.mxu0 0.0
    %1139 = vmatprep.subr.mxu0 0.0
    %1140 = vmatpush1.msra.mxu0 0.0
    %1141 = vmatprep.subr.mxu0 0.0
    %1142 = vmatpush1.msra.mxu0 0.0
    %1143 = vmatprep.subr.mxu0 0.0
    %1144 = vmatpush1.msra.mxu0 0.0
    %1145 = vmatprep.subr.mxu0 0.0
    %1146 = vmatpush1.msra.mxu0 0.0
    %1147 = vmatprep.subr.mxu0 0.0
    %1148 = vmatpush1.msra.mxu0 0.0
    %1149 = vmatprep.subr.mxu0 0.0
    %1150 = vmatpush1.msra.mxu0 0.0
    %1151 = vmatprep.subr.mxu0 0.0
    %1152 = vmatpush1.msra.mxu0 0.0
    %1153 = vmatprep.subr.mxu0 0.0
    %1154 = vmatpush1.msra.mxu0 0.0
    %1155 = vmatprep.subr.mxu0 0.0
    %1156 = vmatpush1.msra.mxu0 0.0
    %1157 = vmatprep.subr.mxu0 0.0
    %1158 = vmatpush1.msra.mxu0 0.0
    %1159 = vmatprep.subr.mxu0 0.0
    %1160 = vmatpush1.msra.mxu0 0.0
    %1161 = vmatprep.subr.mxu0 0.0
    %1162 = vmatpush1.msra.mxu0 0.0
    %1163 = vmatprep.mubr.f32.mxu0 0.0
    %1164 = vmatmul.mubr.f32.gmra.mrb[0].mxu0 %v307
    %v1165 = vpop.f32.mrb[0].mxu0
    %v1166 = vadd.f32 %v1077, %v1165
    %v1167 = vpop.f32.mrb[0].mxu0
    %v1168 = vadd.f32 %v1079, %v1167
    %1169 = vmatprep.mubr.f32.mxu0 0.0
    %1170 = vmatmul.mubr.f32.gmra.mrb[0].mxu0 %v312
    %v1171 = vpop.f32.mrb[0].mxu0
    %v1172 = vadd.f32 %v1083, %v1171
    %v1173 = vpop.f32.mrb[0].mxu0
    %v1174 = vadd.f32 %v1085, %v1173
    %1175 = vmatprep.mubr.f32.mxu0 0.0
    %1176 = vmatmul.mubr.f32.gmra.mrb[0].mxu0 %v317
    %v1177 = vpop.f32.mrb[0].mxu0
    %v1178 = vadd.f32 %v1089, %v1177
    %v1179 = vpop.f32.mrb[0].mxu0
    %v1180 = vadd.f32 %v1091, %v1179
    %1181 = vmatprep.mubr.f32.mxu0 0.0
    %1182 = vmatmul.mubr.f32.gmra.mrb[0].mxu0 %v322
    %v1183 = vpop.f32.mrb[0].mxu0
    %v1184 = vadd.f32 %v1095, %v1183
    %v1185 = vpop.f32.mrb[0].mxu0
    %v1186 = vadd.f32 %v1097, %v1185
    %1187 = vdwg.mxu0
    %v1189 = vlaneseq
    %v1190 = vshrl.u32 %v1189, 7
    %v1191 = vsub.s32 0, %v1190
    %v1192 = vrot.slane %v180, %v1191
    %v1193 = vlaneseq
    %v1194 = vshrl.u32 %v1193, 7
    %v1195 = vsub.s32 1, %v1194
    %v1196 = vrot.slane %v180, %v1195
    %v1199 = vadd.f32 %v1166, %v1192
    %v1200 = vadd.f32 %v1168, %v1196
    %v1201 = vadd.f32 %v1172, %v1192
    %v1202 = vadd.f32 %v1174, %v1196
    %v1203 = vadd.f32 %v1178, %v1192
    %v1204 = vadd.f32 %v1180, %v1196
    %v1205 = vadd.f32 %v1184, %v1192
    %v1206 = vadd.f32 %v1186, %v1196
    %v1207 = vmax.f32 %v1199, 0.0
    %v1208 = vmax.f32 %v1200, 0.0
    %v1209 = vmax.f32 %v1201, 0.0
    %v1210 = vmax.f32 %v1202, 0.0
    %v1211 = vmax.f32 %v1203, 0.0
    %v1212 = vmax.f32 %v1204, 0.0
    %v1213 = vmax.f32 %v1205, 0.0
    %v1214 = vmax.f32 %v1206, 0.0
    %v1216 = vsel %vm741, %v114, 0
    %1218 = vmatprep.subr.mxu0 %v1208
    %1219 = vmatpush1.msra.mxu0 %v1207
    %1220 = vmatprep.subr.mxu0 %v1210
    %1221 = vmatpush1.msra.mxu0 %v1209
    %1222 = vmatprep.subr.mxu0 %v1212
    %1223 = vmatpush1.msra.mxu0 %v1211
    %1224 = vmatprep.subr.mxu0 %v1214
    %1225 = vmatpush1.msra.mxu0 %v1213
    %1226 = vmatprep.subr.mxu0 0.0
    %1227 = vmatpush1.msra.mxu0 0.0
    %1228 = vmatprep.subr.mxu0 0.0
    %1229 = vmatpush1.msra.mxu0 0.0
    %1230 = vmatprep.subr.mxu0 0.0
    %1231 = vmatpush1.msra.mxu0 0.0
    %1232 = vmatprep.subr.mxu0 0.0
    %1233 = vmatpush1.msra.mxu0 0.0
    %1234 = vmatprep.subr.mxu0 0.0
    %1235 = vmatpush1.msra.mxu0 0.0
    %1236 = vmatprep.subr.mxu0 0.0
    %1237 = vmatpush1.msra.mxu0 0.0
    %1238 = vmatprep.subr.mxu0 0.0
    %1239 = vmatpush1.msra.mxu0 0.0
    %1240 = vmatprep.subr.mxu0 0.0
    %1241 = vmatpush1.msra.mxu0 0.0
    %1242 = vmatprep.subr.mxu0 0.0
    %1243 = vmatpush1.msra.mxu0 0.0
    %1244 = vmatprep.subr.mxu0 0.0
    %1245 = vmatpush1.msra.mxu0 0.0
    %1246 = vmatprep.subr.mxu0 0.0
    %1247 = vmatpush1.msra.mxu0 0.0
    %1248 = vmatprep.subr.mxu0 0.0
    %1249 = vmatpush1.msra.mxu0 0.0
    %1250 = vmatprep.subr.mxu0 0.0
    %1251 = vmatpush1.msra.mxu0 0.0
    %1252 = vmatprep.subr.mxu0 0.0
    %1253 = vmatpush1.msra.mxu0 0.0
    %1254 = vmatprep.subr.mxu0 0.0
    %1255 = vmatpush1.msra.mxu0 0.0
    %1256 = vmatprep.subr.mxu0 0.0
    %1257 = vmatpush1.msra.mxu0 0.0
    %1258 = vmatprep.subr.mxu0 0.0
    %1259 = vmatpush1.msra.mxu0 0.0
    %1260 = vmatprep.subr.mxu0 0.0
    %1261 = vmatpush1.msra.mxu0 0.0
    %1262 = vmatprep.subr.mxu0 0.0
    %1263 = vmatpush1.msra.mxu0 0.0
    %1264 = vmatprep.subr.mxu0 0.0
    %1265 = vmatpush1.msra.mxu0 0.0
    %1266 = vmatprep.subr.mxu0 0.0
    %1267 = vmatpush1.msra.mxu0 0.0
    %1268 = vmatprep.subr.mxu0 0.0
    %1269 = vmatpush1.msra.mxu0 0.0
    %1270 = vmatprep.subr.mxu0 0.0
    %1271 = vmatpush1.msra.mxu0 0.0
    %1272 = vmatprep.subr.mxu0 0.0
    %1273 = vmatpush1.msra.mxu0 0.0
    %1274 = vmatprep.subr.mxu0 0.0
    %1275 = vmatpush1.msra.mxu0 0.0
    %1276 = vmatprep.subr.mxu0 0.0
    %1277 = vmatpush1.msra.mxu0 0.0
    %1278 = vmatprep.subr.mxu0 0.0
    %1279 = vmatpush1.msra.mxu0 0.0
    %1280 = vmatprep.subr.mxu0 0.0
    %1281 = vmatpush1.msra.mxu0 0.0
    %1282 = vmatprep.mubr.f32.mxu0 0.0
    %1283 = vmatmul.mubr.f32.gmra.mrb[0].mxu0 %v1216
    %v1284 = vpop.f32.mrb[0].mxu0
    %v1285 = vadd.f32 0.0, %v1284
    %v1286 = vpop.f32.mrb[0].mxu0
    %v1287 = vadd.f32 0.0, %v1286
    %1288 = vdwg.mxu0
    %v1289 = vlaneseq
    %v1290 = vshrl.u32 %v1289, 7
    %v1291 = vsub.s32 0, %v1290
    %v1292 = vrot.slane %v113, %v1291
    %1293 = vmatprep.subr.mxu0 0.0
    %1294 = vmatpush1.msra.mxu0 %v81
    %1295 = vmatprep.subr.mxu0 0.0
    %1296 = vmatpush1.msra.mxu0 %v82
    %1297 = vmatprep.subr.mxu0 0.0
    %1298 = vmatpush1.msra.mxu0 %v83
    %1299 = vmatprep.subr.mxu0 0.0
    %1300 = vmatpush1.msra.mxu0 %v84
    %1301 = vmatprep.subr.mxu0 0.0
    %1302 = vmatpush1.msra.mxu0 %v85
    %1303 = vmatprep.subr.mxu0 0.0
    %1304 = vmatpush1.msra.mxu0 %v86
    %1305 = vmatprep.subr.mxu0 0.0
    %1306 = vmatpush1.msra.mxu0 %v87
    %1307 = vmatprep.subr.mxu0 0.0
    %1308 = vmatpush1.msra.mxu0 %v88
    %1309 = vmatprep.subr.mxu0 0.0
    %1310 = vmatpush1.msra.mxu0 %v89
    %1311 = vmatprep.subr.mxu0 0.0
    %1312 = vmatpush1.msra.mxu0 %v90
    %1313 = vmatprep.subr.mxu0 0.0
    %1314 = vmatpush1.msra.mxu0 %v91
    %1315 = vmatprep.subr.mxu0 0.0
    %1316 = vmatpush1.msra.mxu0 %v92
    %1317 = vmatprep.subr.mxu0 0.0
    %1318 = vmatpush1.msra.mxu0 %v93
    %1319 = vmatprep.subr.mxu0 0.0
    %1320 = vmatpush1.msra.mxu0 %v94
    %1321 = vmatprep.subr.mxu0 0.0
    %1322 = vmatpush1.msra.mxu0 %v95
    %1323 = vmatprep.subr.mxu0 0.0
    %1324 = vmatpush1.msra.mxu0 %v96
    %1325 = vmatprep.subr.mxu0 0.0
    %1326 = vmatpush1.msra.mxu0 %v97
    %1327 = vmatprep.subr.mxu0 0.0
    %1328 = vmatpush1.msra.mxu0 %v98
    %1329 = vmatprep.subr.mxu0 0.0
    %1330 = vmatpush1.msra.mxu0 %v99
    %1331 = vmatprep.subr.mxu0 0.0
    %1332 = vmatpush1.msra.mxu0 %v100
    %1333 = vmatprep.subr.mxu0 0.0
    %1334 = vmatpush1.msra.mxu0 %v101
    %1335 = vmatprep.subr.mxu0 0.0
    %1336 = vmatpush1.msra.mxu0 %v102
    %1337 = vmatprep.subr.mxu0 0.0
    %1338 = vmatpush1.msra.mxu0 %v103
    %1339 = vmatprep.subr.mxu0 0.0
    %1340 = vmatpush1.msra.mxu0 %v104
    %1341 = vmatprep.subr.mxu0 0.0
    %1342 = vmatpush1.msra.mxu0 %v105
    %1343 = vmatprep.subr.mxu0 0.0
    %1344 = vmatpush1.msra.mxu0 %v106
    %1345 = vmatprep.subr.mxu0 0.0
    %1346 = vmatpush1.msra.mxu0 %v107
    %1347 = vmatprep.subr.mxu0 0.0
    %1348 = vmatpush1.msra.mxu0 %v108
    %1349 = vmatprep.subr.mxu0 0.0
    %1350 = vmatpush1.msra.mxu0 %v109
    %1351 = vmatprep.subr.mxu0 0.0
    %1352 = vmatpush1.msra.mxu0 %v110
    %1353 = vmatprep.subr.mxu0 0.0
    %1354 = vmatpush1.msra.mxu0 %v111
    %1355 = vmatprep.subr.mxu0 0.0
    %1356 = vmatpush1.msra.mxu0 %v112
    %1357 = vmatprep.mubr.f32.mxu0 %v1287
    %1358 = vmatmul.mubr.f32.gmra.mrb[0].mxu0 %v1285
    %v1359 = vpop.f32.mrb[0].mxu0
    %v1360 = vadd.f32 %v1292, %v1359
    %v1361 = vpop.f32.mrb[0].mxu0
    %1362 = vdwg.mxu0
    %1363 = vst [vmem:[%s4] sm:$0x3] %v1360
    // Predicated region
    $region22: #{model_forward.1} parent=1 // pred_check
      _
    $region23: #{model_forward.1} parent=1 // pred_check_branch
      %1365 = sbr.rel (0) target = $region25
    $region24: #{model_forward.1} parent=1 // pred_region
      _
    $region25: #{model_forward.1} parent=1 // pred_fallthru
      _
    // Predicated region
    $region26: #{model_forward.1} parent=1 // pred_check
      _
    $region27: #{model_forward.1} parent=1 // pred_check_branch
      %1367 = sbr.rel (0) target = $region29
    $region28: #{model_forward.1} parent=1 // pred_region
      _
    $region29: #{model_forward.1} parent=1 // pred_fallthru
      _
    %1368 = vsyncpa [#allocation3], 1

</llo_original>
